<compile_context>
chip_gen: v7x
topology: tpu7x:2x2x1
jax: 0.10.0
libtpu: 0.0.40
codegen_flags: <defaults>
</compile_context>

<pallas_src>
import functools
import math

import jax
import jax.numpy as jnp
from jax import lax
from jax.experimental import pallas as pl
from jax.experimental.pallas import tpu as pltpu

EPS = 1e-4  # clamp epsilon used by the CKN reference implementation


# ----------------------------- Pallas kernels ------------------------------

def _ckn_fused_layer_kernel(x_ref, w_ref, lt_ref, *rest,
                            H, W, Cp, k, alpha, eps, pool):
    """Fused CKN layer for one image, with the pixel axis (n = H*W) on lanes.

    x_ref    : (Cp, n + 2L) f32  channel-planar image; flat pixel axis zero-padded by
                                 L = pad*(W+1) on each side (covers SAME padding in H;
                                 W padding is handled by per-tap column masks).
    w_ref    : (oc, k*k*Cp) bf16 filters, columns in (tap, channel) order, pad chans = 0.
    lt_ref   : (oc, oc)     bf16 kappa(W W^T)^{-1/2} (symmetric).
    p2t_ref  : (n, P)       bf16 transposed Gaussian-pooling matrix (only when pool).
    o_ref    : (oc, P)      f32  pooled output, channel-planar (NCHW pixel order).
    patch_ref: (k*k*Cp, n)  bf16 VMEM scratch -- im2col built in VMEM, never in HBM.
    """
    if pool:
        p2t_ref, o_ref, patch_ref = rest
    else:
        o_ref, patch_ref = rest

    n = H * W
    pad = k // 2
    L = pad * (W + 1)

    # k distinct per-column masks (one per dj offset), hoisted out of the tap loop
    # (JAX does not CSE broadcasts).  0/1 float rows multiply cleanly on the VPU.
    col = lax.broadcasted_iota(jnp.int32, (1, n), 1) % W
    col_masks = []
    for dj in range(k):
        doff = dj - pad
        if doff < 0:
            col_masks.append((col >= (-doff)).astype(jnp.float32))
        elif doff > 0:
            col_masks.append((col < (W - doff)).astype(jnp.float32))
        else:
            col_masks.append(None)

    # ---- in-VMEM im2col: each tap is one contiguous lane-slice of the padded slab.
    #      bf16 scratch writes; f32 per-pixel sum-of-squares accumulated per tap.
    sq = jnp.zeros((1, n), jnp.float32)
    t = 0
    for di in range(k):
        for dj in range(k):
            off = (di - pad) * W + (dj - pad)
            slab = x_ref[:, L + off: L + off + n]                   # (Cp, n) f32
            m = col_masks[dj]
            if m is not None:
                slab = slab * m                                     # SAME padding in W
            patch_ref[t * Cp:(t + 1) * Cp, :] = slab.astype(jnp.bfloat16)
            sq = sq + jnp.sum(slab * slab, axis=0, keepdims=True)   # (1, n) f32
            t += 1

    norm = jnp.sqrt(jnp.maximum(sq, eps))                           # (1, n), >= sqrt(eps)

    # ---- conv = W @ patches  (bf16 MXU operands, f32 accumulation) -> (oc, n)
    conv = jnp.dot(w_ref[...], patch_ref[...], preferred_element_type=jnp.float32)

    # ---- kappa_exp: lane-dense (oc, n) elementwise; reciprocal/exp go to the EUP.
    #      approx reciprocal error (~2^-12) x alpha is well inside the test tolerance.
    u = conv * pl.reciprocal(norm, approx=True)
    act = norm * jnp.exp(alpha * (u - 1.0))                         # (oc, n) f32

    # ---- lintrans multiply (bf16 MXU, f32 accumulation) -> (oc, n)
    y = jnp.dot(lt_ref[...], act.astype(jnp.bfloat16), preferred_element_type=jnp.float32)

    # ---- fused Gaussian pooling: one bf16 MXU matmul; skipped when subsampling == 1.
    if pool:
        o_ref[...] = jnp.dot(y.astype(jnp.bfloat16), p2t_ref[...],
                             preferred_element_type=jnp.float32)    # (oc, P)
    else:
        o_ref[...] = y


def _classifier_kernel(x_ref, w_ref, b_ref, o_ref):
    # x_ref: (B, F) bf16; w_ref: (F, Cpad) bf16; b_ref: (1, Cpad) f32; o_ref: (B, Cpad) f32
    o_ref[...] = (jnp.dot(x_ref[...], w_ref[...], preferred_element_type=jnp.float32)
                  + b_ref[...])


# ------------------------------- helpers ------------------------------------

def gaussian_filter_1d(size, sigma):
    if size == 1:
        return jnp.ones((1,), dtype=jnp.float32)
    m = (size - 1) / 2.0
    filt = jnp.arange(-m, m + 1, dtype=jnp.float32)
    filt = jnp.exp(-(filt ** 2) / (2.0 * sigma * sigma))
    return filt / jnp.sum(filt)


def gaussian_filter_2d(size, sigma):
    g = gaussian_filter_1d(size, sigma)
    return jnp.outer(g, g).reshape(-1)


def _pool_matrix_1d(length, s):
    """(out_len, length) matrix for 1-D Gaussian pooling: kernel 2s+1, stride s,
    zero padding s, sigma = s/sqrt(2) -- identical to the depthwise conv2d pooling."""
    f = 2 * s + 1
    g = gaussian_filter_1d(f, s / math.sqrt(2.0))
    out_len = (length - 1) // s + 1
    o = jnp.arange(out_len)[:, None]
    r = jnp.arange(length)[None, :]
    t = r - (o * s - s)
    valid = (t >= 0) & (t < f)
    return jnp.where(valid, g[jnp.clip(t, 0, f - 1)], 0.0).astype(jnp.float32)


def matrix_inverse_sqrt(m, eps=1e-2):
    e, v = jnp.linalg.eigh(m)
    e = jnp.clip(e, 0.0, None)
    inv_sqrt = 1.0 / (jnp.sqrt(e) + eps)
    return (v * inv_sqrt[None, :]) @ v.T


# ------------------------------- wrappers ------------------------------------

def init_cknet_params(key, in_channels, out_channels_list, kernel_sizes, nclass, out_features):
    params = {"layers": []}
    c_in = in_channels
    for oc, k in zip(out_channels_list, kernel_sizes):
        key, sub = jax.random.split(key)
        # Filter rows in natural (tap, channel) patch-column order.
        w = jax.random.normal(sub, (oc, c_in * k * k), dtype=jnp.float32)
        w = w / jnp.linalg.norm(w, axis=1, keepdims=True)   # CKN filters on the unit sphere
        params["layers"].append(w)
        c_in = oc
    key, kw, kb = jax.random.split(key, 3)
    params["clf_w"] = 0.01 * jax.random.normal(kw, (nclass, out_features), dtype=jnp.float32)
    params["clf_b"] = 0.01 * jax.random.normal(kb, (nclass,), dtype=jnp.float32)
    return params


def prepare_cknet(params, in_channels, image_size, kernel_sizes, subsamplings, alphas):
    """Hoist everything data-independent out of the forward pass: lintrans (eigh),
    pooling matrices, channel padding and all bf16 casts."""
    layers = []
    H = W = image_size
    C = in_channels
    for w, k, s, alpha in zip(params["layers"], kernel_sizes, subsamplings, alphas):
        oc = w.shape[0]
        n = H * W
        Cp = 8 * ((C + 7) // 8)   # sublane-aligned channel count for the bf16 scratch
        w3 = w.reshape(oc, k * k, C)
        w_pad = jnp.zeros((oc, k * k, Cp), jnp.float32).at[:, :, :C].set(w3)
        w_bf = w_pad.reshape(oc, k * k * Cp).astype(jnp.bfloat16)
        lt_bf = matrix_inverse_sqrt(jnp.exp(alpha * (w @ w.T - 1.0))).astype(jnp.bfloat16)

        if s > 1:
            oh = (H - 1) // s + 1
            ow = (W - 1) // s + 1
            Pr = _pool_matrix_1d(H, s)            # (oh, H)
            Pc = _pool_matrix_1d(W, s)            # (ow, W)
            # p2t[(r*W+c), (i*ow+j)] = Pr[i, r] * Pc[j, c]  (transposed pooling matrix)
            p2t_bf = jnp.einsum("ir,jc->rcij", Pr, Pc).reshape(n, oh * ow).astype(jnp.bfloat16)
        else:
            oh, ow = H, W
            p2t_bf = None

        layers.append(dict(w_bf=w_bf, lt_bf=lt_bf, p2t_bf=p2t_bf,
                           meta=dict(H=H, W=W, C=C, Cp=Cp, k=k, s=s,
                                     alpha=float(alpha), oc=oc, oh=oh, ow=ow)))
        H, W, C = oh, ow, oc

    F = H * W * C                                  # NCHW flatten == torch .view(B, -1)
    nclass = params["clf_w"].shape[0]
    ncp = 128 * ((nclass + 127) // 128)            # lane-dense classifier output
    clf_w_bf = (jnp.zeros((F, ncp), jnp.float32)
                .at[:, :nclass].set(params["clf_w"].T).astype(jnp.bfloat16))
    clf_b = jnp.zeros((1, ncp), jnp.float32).at[:, :nclass].set(params["clf_b"][None, :])
    return dict(layers=layers, clf_w_bf=clf_w_bf, clf_b=clf_b,
                nclass=nclass, out_features=F)


def _run_ckn_layer(x, layer, B):
    """x: (B, C, H, W) f32 channel-planar activation.  Returns (B, oc, oh, ow) f32."""
    m = layer["meta"]
    H, W, C, Cp, k = m["H"], m["W"], m["C"], m["Cp"], m["k"]
    oc, oh, ow, s = m["oc"], m["oh"], m["ow"], m["s"]
    pad = k // 2
    n = H * W
    L = pad * (W + 1)
    P = oh * ow
    pool = s > 1

    # channel-planar flat pixel axis, zero-padded channels (-> Cp) and pixel margins (L).
    xflat = x.reshape(B, C, n)
    xp = jnp.pad(xflat, ((0, 0), (0, Cp - C), (L, L)))

    kernel = functools.partial(_ckn_fused_layer_kernel, H=H, W=W, Cp=Cp, k=k,
                               alpha=m["alpha"], eps=EPS, pool=pool)
    in_specs = [
        pl.BlockSpec((None, Cp, n + 2 * L), lambda b: (b, 0, 0)),   # one image slab
        pl.BlockSpec((oc, k * k * Cp), lambda b: (0, 0)),
        pl.BlockSpec((oc, oc), lambda b: (0, 0)),
    ]
    inputs = [xp, layer["w_bf"], layer["lt_bf"]]
    if pool:
        in_specs.append(pl.BlockSpec((n, P), lambda b: (0, 0)))
        inputs.append(layer["p2t_bf"])

    out = pl.pallas_call(
        kernel,
        out_shape=jax.ShapeDtypeStruct((B, oc, P), jnp.float32),
        grid=(B,),
        in_specs=in_specs,
        out_specs=pl.BlockSpec((None, oc, P), lambda b: (b, 0, 0)),
        scratch_shapes=[pltpu.VMEM((k * k * Cp, n), jnp.bfloat16)],  # in-VMEM im2col
        compiler_params=pltpu.CompilerParams(
            dimension_semantics=("parallel",),     # B=2 steps -> both v7x TensorCores
            vmem_limit_bytes=32 * 1024 * 1024,     # fits v5e/v6e/v7x at these shapes
        ),
    )(*inputs)
    return out.reshape(B, oc, oh, ow)


def classifier_core(feats, clf_w_bf, clf_b):
    """feats: (B, F) f32.  Single grid-less Pallas GEMM over the whole batch; class axis
    pre-padded to 128 lanes in prepare_cknet (unmasked lane-dense stores)."""
    B = feats.shape[0]
    ncp = clf_w_bf.shape[1]
    out = pl.pallas_call(
        _classifier_kernel,
        out_shape=jax.ShapeDtypeStruct((B, ncp), jnp.float32),
    )(feats.astype(jnp.bfloat16), clf_w_bf, clf_b)
    return out


def cknet_forward(prepared, x_nchw):
    x = x_nchw.astype(jnp.float32)                 # native NCHW is already channel-planar
    B = x.shape[0]
    for layer in prepared["layers"]:
        x = _run_ckn_layer(x, layer, B)            # (B, oc, oh, ow)
    feats = x.reshape(B, -1)                        # NCHW flatten == torch .view(B, -1)
    logits = classifier_core(feats, prepared["clf_w_bf"], prepared["clf_b"])
    return logits[:, :prepared["nclass"]]


# ------------------------- pure-JAX reference (check) ------------------------

def im2col_same(x, k):
    # Reference only. (B,H,W,C) -> (B*H*W, k*k*C) with (tap, channel) column order.
    B, H, W, C = x.shape
    p = k // 2
    xp = jnp.pad(x, ((0, 0), (p, p), (p, p), (0, 0)))
    cols = [xp[:, i:i + H, j:j + W, :] for i in range(k) for j in range(k)]
    pat = jnp.stack(cols, axis=3)                 # (B, H, W, k*k, C)
    return pat.reshape(B * H * W, k * k * C), (B, H, W)


def pool_patches(y, s):
    # Reference only. Windows for depthwise gaussian conv: size 2s+1, stride s, pad s.
    B, H, W, C = y.shape
    f = 2 * s + 1
    yp = jnp.pad(y, ((0, 0), (s, s), (s, s), (0, 0)))
    oh = (H - 1) // s + 1
    ow = (W - 1) // s + 1
    cols = []
    for i in range(f):
        for j in range(f):
            cols.append(yp[:, i:i + (oh - 1) * s + 1:s, j:j + (ow - 1) * s + 1:s, :])
    pp = jnp.stack(cols, axis=3)                  # (B, oh, ow, f*f, C)
    return pp.reshape(B * oh * ow, f * f, C), (B, oh, ow, C)


def cknet_forward_ref(params, x_nchw, kernel_sizes, subsamplings, alphas):
    # Pure-JAX reference (no Pallas) using the straightforward NHWC im2col / window
    # pooling formulation, mirroring the kernels' mixed-precision policy
    # (bf16 MXU operands, f32 accumulation & elementwise math).
    x = jnp.transpose(x_nchw, (0, 2, 3, 1)).astype(jnp.float32)
    for w, k, s, alpha in zip(params["layers"], kernel_sizes, subsamplings, alphas):
        oc = w.shape[0]
        lintrans = matrix_inverse_sqrt(jnp.exp(alpha * (w @ w.T - 1.0)))
        patches, (B, H, W) = im2col_same(x, k)
        norm = jnp.sqrt(jnp.maximum(jnp.sum(patches ** 2, -1, keepdims=True), EPS))
        conv = jnp.dot(patches.astype(jnp.bfloat16), w.T.astype(jnp.bfloat16),
                       preferred_element_type=jnp.float32)
        act = norm * jnp.exp(alpha * (conv / norm - 1.0))
        y = jnp.dot(act.astype(jnp.bfloat16), lintrans.astype(jnp.bfloat16),
                    preferred_element_type=jnp.float32).reshape(B, H, W, oc)
        if s > 1:
            pp, out_shape = pool_patches(y, s)
            g2d = gaussian_filter_2d(2 * s + 1, s / math.sqrt(2.0))
            y = jnp.einsum("nkc,k->nc", pp.astype(jnp.bfloat16), g2d.astype(jnp.bfloat16),
                           preferred_element_type=jnp.float32).reshape(out_shape)
        x = y
    B = x.shape[0]
    feats = jnp.transpose(x, (0, 3, 1, 2)).reshape(B, -1)          # NCHW flatten (torch)
    return (jnp.dot(feats.astype(jnp.bfloat16), params["clf_w"].T.astype(jnp.bfloat16),
                    preferred_element_type=jnp.float32) + params["clf_b"])


# TODO(synk): training-time utilities (unsup_train_*, predict, normalize_, fit of the
#             Linear classifier) are optimizer/data-loader logic, not forward compute,
#             and are not translated.

if __name__ == "__main__":
    # Small CKNet config: nclass=10, in_channels=3, layers [8, 32], 3x3 kernels, subsampling 2,2
    nclass = 10
    in_channels = 3
    out_channels_list = [8, 32]
    kernel_sizes = [3, 3]
    subsamplings = [2, 2]
    image_size = 16
    kernel_args = 0.5
    alphas = [1.0 / (kernel_args ** 2)] * len(out_channels_list)   # exp kernel: alpha = 1/sigma^2

    factor = 1
    for s in subsamplings:
        factor *= s
    factor = (image_size - 1) // factor + 1
    out_features = factor * factor * out_channels_list[-1]

    key = jax.random.PRNGKey(0)
    key, kx, kp = jax.random.split(key, 3)
    x = jax.random.normal(kx, (2, in_channels, image_size, image_size), dtype=jnp.float32)
    params = init_cknet_params(kp, in_channels, out_channels_list, kernel_sizes,
                               nclass, out_features)

    # Everything data-independent (eigh, pooling matrices, bf16 casts) happens ONCE here.
    prepared = prepare_cknet(params, in_channels, image_size, kernel_sizes,
                             subsamplings, alphas)
    fwd = jax.jit(lambda xin: cknet_forward(prepared, xin))

    logits = jax.block_until_ready(fwd(x))

    ref = jax.block_until_ready(
        cknet_forward_ref(params, x, kernel_sizes, subsamplings, alphas))

    assert logits.shape == (2, nclass), logits.shape
    assert bool(jnp.all(jnp.isfinite(logits)))
    assert bool(jnp.allclose(logits, ref, rtol=5e-2, atol=5e-2)), (logits, ref)
    print("KERNEL_OK")
</pallas_src>

<mosaic_0001>
module attributes {stable_mosaic.version = 11 : i64} {
  func.func @_ckn_fused_layer_kernel(%arg0: i32, %arg1: memref<1x8x290xf32, #tpu.memory_space<vmem>>, %arg2: memref<8x72xbf16, #tpu.memory_space<vmem>>, %arg3: memref<8x8xbf16, #tpu.memory_space<vmem>>, %arg4: memref<256x64xbf16, #tpu.memory_space<vmem>>, %arg5: memref<1x8x64xf32, #tpu.memory_space<vmem>>, %arg6: memref<72x256xbf16, #tpu.memory_space<vmem>>) attributes {dimension_semantics = [#tpu.dimension_semantics<parallel>], iteration_bounds = array<i64: 2>, scalar_prefetch = 0 : i64, scratch_operands = 1 : i64, tpu.core_type = #tpu.core_type<tc>, window_params = [{transform_indices = @transform_0, window_bounds = array<i64: 1, 8, 290>}, {pipeline_mode = #tpu.pipeline_mode<synchronous>, transform_indices = @transform_1, window_bounds = array<i64: 8, 72>}, {pipeline_mode = #tpu.pipeline_mode<synchronous>, transform_indices = @transform_2, window_bounds = array<i64: 8, 8>}, {pipeline_mode = #tpu.pipeline_mode<synchronous>, transform_indices = @transform_3, window_bounds = array<i64: 256, 64>}, {transform_indices = @transform_4, window_bounds = array<i64: 1, 8, 64>}]} {
    %0 = tpu.iota {dimensions = array<i32: 1>} : vector<1x256xi32>
    %c16_i32 = arith.constant 16 : i32
    %c0_i32 = arith.constant 0 : i32
    %1 = arith.cmpi eq, %c16_i32, %c0_i32 : i32
    %c1_i32 = arith.constant 1 : i32
    %2 = arith.select %1, %c1_i32, %c16_i32 : i32
    %3 = vector.broadcast %2 : i32 to vector<1x256xi32>
    %4 = arith.remsi %0, %3 : vector<1x256xi32>
    %c0_i32_0 = arith.constant 0 : i32
    %5 = vector.broadcast %c0_i32_0 : i32 to vector<1x256xi32>
    %6 = arith.cmpi ne, %4, %5 : vector<1x256xi32>
    %c0_i32_1 = arith.constant 0 : i32
    %7 = vector.broadcast %c0_i32_1 : i32 to vector<1x256xi32>
    %8 = arith.cmpi slt, %4, %7 : vector<1x256xi32>
    %c0_i32_2 = arith.constant 0 : i32
    %9 = arith.cmpi slt, %2, %c0_i32_2 : i32
    %10 = vector.broadcast %9 : i1 to vector<1x256xi1>
    %11 = vector.broadcast %10 : vector<1x256xi1> to vector<1x256xi1>
    %12 = arith.xori %8, %11 : vector<1x256xi1>
    %13 = arith.andi %12, %6 : vector<1x256xi1>
    %14 = vector.broadcast %2 : i32 to vector<1x256xi32>
    %15 = arith.addi %4, %14 : vector<1x256xi32>
    %16 = arith.select %13, %15, %4 : vector<1x256xi1>, vector<1x256xi32>
    %c1_i32_3 = arith.constant 1 : i32
    %17 = vector.broadcast %c1_i32_3 : i32 to vector<1x256xi32>
    %18 = arith.cmpi sge, %16, %17 : vector<1x256xi32>
    %19 = arith.extui %18 : vector<1x256xi1> to vector<1x256xi32>
    %20 = arith.sitofp %19 : vector<1x256xi32> to vector<1x256xf32>
    %c15_i32 = arith.constant 15 : i32
    %21 = vector.broadcast %c15_i32 : i32 to vector<1x256xi32>
    %22 = arith.cmpi slt, %16, %21 : vector<1x256xi32>
    %23 = arith.extui %22 : vector<1x256xi1> to vector<1x256xi32>
    %24 = arith.sitofp %23 : vector<1x256xi32> to vector<1x256xf32>
    %cst = arith.constant 0.000000e+00 : f32
    %25 = vector.broadcast %cst : f32 to vector<1x256xf32>
    %c0 = arith.constant 0 : index
    %c0_4 = arith.constant 0 : index
    %c0_5 = arith.constant 0 : index
    %26 = vector.load %arg1[%c0, %c0_4, %c0_5] : memref<1x8x290xf32, #tpu.memory_space<vmem>>, vector<1x8x256xf32>
    %27 = vector.shape_cast %26 : vector<1x8x256xf32> to vector<8x256xf32>
    %28 = vector.broadcast %20 : vector<1x256xf32> to vector<8x256xf32>
    %29 = arith.mulf %27, %28 : vector<8x256xf32>
    %30 = arith.truncf %29 : vector<8x256xf32> to vector<8x256xbf16>
    %c0_6 = arith.constant 0 : index
    %c0_7 = arith.constant 0 : index
    %31 = vector.load %arg6[%c0_6, %c0_7] : memref<72x256xbf16, #tpu.memory_space<vmem>>, vector<8x256xbf16>
    tpu.vector_store %arg6[%c0_6, %c0_7], %30 {strides = array<i32>} : memref<72x256xbf16, #tpu.memory_space<vmem>>, vector<8x256xbf16>,
    %32 = arith.mulf %29, %29 : vector<8x256xf32>
    %cst_8 = arith.constant dense<0.000000e+00> : vector<256xf32>
    %33 = vector.multi_reduction <add>, %32, %cst_8 [0] : vector<8x256xf32> to vector<256xf32>
    %34 = vector.shape_cast %33 : vector<256xf32> to vector<1x256xf32>
    %35 = arith.addf %25, %34 : vector<1x256xf32>
    %c0_9 = arith.constant 0 : index
    %c0_10 = arith.constant 0 : index
    %c1 = arith.constant 1 : index
    %36 = vector.load %arg1[%c0_9, %c0_10, %c1] : memref<1x8x290xf32, #tpu.memory_space<vmem>>, vector<1x8x256xf32>
    %37 = vector.shape_cast %36 : vector<1x8x256xf32> to vector<8x256xf32>
    %38 = arith.truncf %37 : vector<8x256xf32> to vector<8x256xbf16>
    %c8 = arith.constant 8 : index
    %c0_11 = arith.constant 0 : index
    %39 = vector.load %arg6[%c8, %c0_11] : memref<72x256xbf16, #tpu.memory_space<vmem>>, vector<8x256xbf16>
    tpu.vector_store %arg6[%c8, %c0_11], %38 {strides = array<i32>} : memref<72x256xbf16, #tpu.memory_space<vmem>>, vector<8x256xbf16>,
    %40 = arith.mulf %37, %37 : vector<8x256xf32>
    %cst_12 = arith.constant dense<0.000000e+00> : vector<256xf32>
    %41 = vector.multi_reduction <add>, %40, %cst_12 [0] : vector<8x256xf32> to vector<256xf32>
    %42 = vector.shape_cast %41 : vector<256xf32> to vector<1x256xf32>
    %43 = arith.addf %35, %42 : vector<1x256xf32>
    %c0_13 = arith.constant 0 : index
    %c0_14 = arith.constant 0 : index
    %c2 = arith.constant 2 : index
    %44 = vector.load %arg1[%c0_13, %c0_14, %c2] : memref<1x8x290xf32, #tpu.memory_space<vmem>>, vector<1x8x256xf32>
    %45 = vector.shape_cast %44 : vector<1x8x256xf32> to vector<8x256xf32>
    %46 = vector.broadcast %24 : vector<1x256xf32> to vector<8x256xf32>
    %47 = arith.mulf %45, %46 : vector<8x256xf32>
    %48 = arith.truncf %47 : vector<8x256xf32> to vector<8x256xbf16>
    %c16 = arith.constant 16 : index
    %c0_15 = arith.constant 0 : index
    %49 = vector.load %arg6[%c16, %c0_15] : memref<72x256xbf16, #tpu.memory_space<vmem>>, vector<8x256xbf16>
    tpu.vector_store %arg6[%c16, %c0_15], %48 {strides = array<i32>} : memref<72x256xbf16, #tpu.memory_space<vmem>>, vector<8x256xbf16>,
    %50 = arith.mulf %47, %47 : vector<8x256xf32>
    %cst_16 = arith.constant dense<0.000000e+00> : vector<256xf32>
    %51 = vector.multi_reduction <add>, %50, %cst_16 [0] : vector<8x256xf32> to vector<256xf32>
    %52 = vector.shape_cast %51 : vector<256xf32> to vector<1x256xf32>
    %53 = arith.addf %43, %52 : vector<1x256xf32>
    %c0_17 = arith.constant 0 : index
    %c0_18 = arith.constant 0 : index
    %c16_19 = arith.constant 16 : index
    %54 = vector.load %arg1[%c0_17, %c0_18, %c16_19] : memref<1x8x290xf32, #tpu.memory_space<vmem>>, vector<1x8x256xf32>
    %55 = vector.shape_cast %54 : vector<1x8x256xf32> to vector<8x256xf32>
    %56 = vector.broadcast %20 : vector<1x256xf32> to vector<8x256xf32>
    %57 = arith.mulf %55, %56 : vector<8x256xf32>
    %58 = arith.truncf %57 : vector<8x256xf32> to vector<8x256xbf16>
    %c24 = arith.constant 24 : index
    %c0_20 = arith.constant 0 : index
    %59 = vector.load %arg6[%c24, %c0_20] : memref<72x256xbf16, #tpu.memory_space<vmem>>, vector<8x256xbf16>
    tpu.vector_store %arg6[%c24, %c0_20], %58 {strides = array<i32>} : memref<72x256xbf16, #tpu.memory_space<vmem>>, vector<8x256xbf16>,
    %60 = arith.mulf %57, %57 : vector<8x256xf32>
    %cst_21 = arith.constant dense<0.000000e+00> : vector<256xf32>
    %61 = vector.multi_reduction <add>, %60, %cst_21 [0] : vector<8x256xf32> to vector<256xf32>
    %62 = vector.shape_cast %61 : vector<256xf32> to vector<1x256xf32>
    %63 = arith.addf %53, %62 : vector<1x256xf32>
    %c0_22 = arith.constant 0 : index
    %c0_23 = arith.constant 0 : index
    %c17 = arith.constant 17 : index
    %64 = vector.load %arg1[%c0_22, %c0_23, %c17] : memref<1x8x290xf32, #tpu.memory_space<vmem>>, vector<1x8x256xf32>
    %65 = vector.shape_cast %64 : vector<1x8x256xf32> to vector<8x256xf32>
    %66 = arith.truncf %65 : vector<8x256xf32> to vector<8x256xbf16>
    %c32 = arith.constant 32 : index
    %c0_24 = arith.constant 0 : index
    %67 = vector.load %arg6[%c32, %c0_24] : memref<72x256xbf16, #tpu.memory_space<vmem>>, vector<8x256xbf16>
    tpu.vector_store %arg6[%c32, %c0_24], %66 {strides = array<i32>} : memref<72x256xbf16, #tpu.memory_space<vmem>>, vector<8x256xbf16>,
    %68 = arith.mulf %65, %65 : vector<8x256xf32>
    %cst_25 = arith.constant dense<0.000000e+00> : vector<256xf32>
    %69 = vector.multi_reduction <add>, %68, %cst_25 [0] : vector<8x256xf32> to vector<256xf32>
    %70 = vector.shape_cast %69 : vector<256xf32> to vector<1x256xf32>
    %71 = arith.addf %63, %70 : vector<1x256xf32>
    %c0_26 = arith.constant 0 : index
    %c0_27 = arith.constant 0 : index
    %c18 = arith.constant 18 : index
    %72 = vector.load %arg1[%c0_26, %c0_27, %c18] : memref<1x8x290xf32, #tpu.memory_space<vmem>>, vector<1x8x256xf32>
    %73 = vector.shape_cast %72 : vector<1x8x256xf32> to vector<8x256xf32>
    %74 = vector.broadcast %24 : vector<1x256xf32> to vector<8x256xf32>
    %75 = arith.mulf %73, %74 : vector<8x256xf32>
    %76 = arith.truncf %75 : vector<8x256xf32> to vector<8x256xbf16>
    %c40 = arith.constant 40 : index
    %c0_28 = arith.constant 0 : index
    %77 = vector.load %arg6[%c40, %c0_28] : memref<72x256xbf16, #tpu.memory_space<vmem>>, vector<8x256xbf16>
    tpu.vector_store %arg6[%c40, %c0_28], %76 {strides = array<i32>} : memref<72x256xbf16, #tpu.memory_space<vmem>>, vector<8x256xbf16>,
    %78 = arith.mulf %75, %75 : vector<8x256xf32>
    %cst_29 = arith.constant dense<0.000000e+00> : vector<256xf32>
    %79 = vector.multi_reduction <add>, %78, %cst_29 [0] : vector<8x256xf32> to vector<256xf32>
    %80 = vector.shape_cast %79 : vector<256xf32> to vector<1x256xf32>
    %81 = arith.addf %71, %80 : vector<1x256xf32>
    %c0_30 = arith.constant 0 : index
    %c0_31 = arith.constant 0 : index
    %c32_32 = arith.constant 32 : index
    %82 = vector.load %arg1[%c0_30, %c0_31, %c32_32] : memref<1x8x290xf32, #tpu.memory_space<vmem>>, vector<1x8x256xf32>
    %83 = vector.shape_cast %82 : vector<1x8x256xf32> to vector<8x256xf32>
    %84 = vector.broadcast %20 : vector<1x256xf32> to vector<8x256xf32>
    %85 = arith.mulf %83, %84 : vector<8x256xf32>
    %86 = arith.truncf %85 : vector<8x256xf32> to vector<8x256xbf16>
    %c48 = arith.constant 48 : index
    %c0_33 = arith.constant 0 : index
    %87 = vector.load %arg6[%c48, %c0_33] : memref<72x256xbf16, #tpu.memory_space<vmem>>, vector<8x256xbf16>
    tpu.vector_store %arg6[%c48, %c0_33], %86 {strides = array<i32>} : memref<72x256xbf16, #tpu.memory_space<vmem>>, vector<8x256xbf16>,
    %88 = arith.mulf %85, %85 : vector<8x256xf32>
    %cst_34 = arith.constant dense<0.000000e+00> : vector<256xf32>
    %89 = vector.multi_reduction <add>, %88, %cst_34 [0] : vector<8x256xf32> to vector<256xf32>
    %90 = vector.shape_cast %89 : vector<256xf32> to vector<1x256xf32>
    %91 = arith.addf %81, %90 : vector<1x256xf32>
    %c0_35 = arith.constant 0 : index
    %c0_36 = arith.constant 0 : index
    %c33 = arith.constant 33 : index
    %92 = vector.load %arg1[%c0_35, %c0_36, %c33] : memref<1x8x290xf32, #tpu.memory_space<vmem>>, vector<1x8x256xf32>
    %93 = vector.shape_cast %92 : vector<1x8x256xf32> to vector<8x256xf32>
    %94 = arith.truncf %93 : vector<8x256xf32> to vector<8x256xbf16>
    %c56 = arith.constant 56 : index
    %c0_37 = arith.constant 0 : index
    %95 = vector.load %arg6[%c56, %c0_37] : memref<72x256xbf16, #tpu.memory_space<vmem>>, vector<8x256xbf16>
    tpu.vector_store %arg6[%c56, %c0_37], %94 {strides = array<i32>} : memref<72x256xbf16, #tpu.memory_space<vmem>>, vector<8x256xbf16>,
    %96 = arith.mulf %93, %93 : vector<8x256xf32>
    %cst_38 = arith.constant dense<0.000000e+00> : vector<256xf32>
    %97 = vector.multi_reduction <add>, %96, %cst_38 [0] : vector<8x256xf32> to vector<256xf32>
    %98 = vector.shape_cast %97 : vector<256xf32> to vector<1x256xf32>
    %99 = arith.addf %91, %98 : vector<1x256xf32>
    %c0_39 = arith.constant 0 : index
    %c0_40 = arith.constant 0 : index
    %c34 = arith.constant 34 : index
    %100 = vector.load %arg1[%c0_39, %c0_40, %c34] : memref<1x8x290xf32, #tpu.memory_space<vmem>>, vector<1x8x256xf32>
    %101 = vector.shape_cast %100 : vector<1x8x256xf32> to vector<8x256xf32>
    %102 = vector.broadcast %24 : vector<1x256xf32> to vector<8x256xf32>
    %103 = arith.mulf %101, %102 : vector<8x256xf32>
    %104 = arith.truncf %103 : vector<8x256xf32> to vector<8x256xbf16>
    %c64 = arith.constant 64 : index
    %c0_41 = arith.constant 0 : index
    %105 = vector.load %arg6[%c64, %c0_41] : memref<72x256xbf16, #tpu.memory_space<vmem>>, vector<8x256xbf16>
    tpu.vector_store %arg6[%c64, %c0_41], %104 {strides = array<i32>} : memref<72x256xbf16, #tpu.memory_space<vmem>>, vector<8x256xbf16>,
    %106 = arith.mulf %103, %103 : vector<8x256xf32>
    %cst_42 = arith.constant dense<0.000000e+00> : vector<256xf32>
    %107 = vector.multi_reduction <add>, %106, %cst_42 [0] : vector<8x256xf32> to vector<256xf32>
    %108 = vector.shape_cast %107 : vector<256xf32> to vector<1x256xf32>
    %109 = arith.addf %99, %108 : vector<1x256xf32>
    %cst_43 = arith.constant 9.99999974E-5 : f32
    %110 = vector.broadcast %cst_43 : f32 to vector<1x256xf32>
    %111 = arith.maximumf %109, %110 : vector<1x256xf32>
    %112 = math.sqrt %111 : vector<1x256xf32>
    %c0_44 = arith.constant 0 : index
    %c0_45 = arith.constant 0 : index
    %113 = vector.load %arg2[%c0_44, %c0_45] : memref<8x72xbf16, #tpu.memory_space<vmem>>, vector<8x72xbf16>
    %c0_46 = arith.constant 0 : index
    %c0_47 = arith.constant 0 : index
    %114 = vector.load %arg6[%c0_46, %c0_47] : memref<72x256xbf16, #tpu.memory_space<vmem>>, vector<72x256xbf16>
    %cst_48 = arith.constant dense<0.000000e+00> : vector<8x256xf32>
    %115 = tpu.matmul %113, %114, %cst_48 {dimension_numbers = #tpu.dot_dimension_numbers<[1], [0], [0], [1], [0, 0, 1, 1], [], []>} : vector<8x72xbf16>, vector<72x256xbf16>, vector<8x256xf32> -> vector<8x256xf32>
    %116 = tpu.reciprocal %112 {approx = true} : vector<1x256xf32> -> vector<1x256xf32>
    %117 = vector.broadcast %116 : vector<1x256xf32> to vector<8x256xf32>
    %118 = arith.mulf %115, %117 : vector<8x256xf32>
    %cst_49 = arith.constant 1.000000e+00 : f32
    %119 = vector.broadcast %cst_49 : f32 to vector<8x256xf32>
    %120 = arith.subf %118, %119 : vector<8x256xf32>
    %cst_50 = arith.constant 4.000000e+00 : f32
    %121 = vector.broadcast %cst_50 : f32 to vector<8x256xf32>
    %122 = arith.mulf %121, %120 : vector<8x256xf32>
    %123 = math.exp %122 : vector<8x256xf32>
    %124 = vector.broadcast %112 : vector<1x256xf32> to vector<8x256xf32>
    %125 = arith.mulf %124, %123 : vector<8x256xf32>
    %c0_51 = arith.constant 0 : index
    %c0_52 = arith.constant 0 : index
    %126 = vector.load %arg3[%c0_51, %c0_52] : memref<8x8xbf16, #tpu.memory_space<vmem>>, vector<8x8xbf16>
    %127 = arith.truncf %125 : vector<8x256xf32> to vector<8x256xbf16>
    %cst_53 = arith.constant dense<0.000000e+00> : vector<8x256xf32>
    %128 = tpu.matmul %126, %127, %cst_53 {dimension_numbers = #tpu.dot_dimension_numbers<[1], [0], [0], [1], [0, 0, 1, 1], [], []>} : vector<8x8xbf16>, vector<8x256xbf16>, vector<8x256xf32> -> vector<8x256xf32>
    %129 = arith.truncf %128 : vector<8x256xf32> to vector<8x256xbf16>
    %c0_54 = arith.constant 0 : index
    %c0_55 = arith.constant 0 : index
    %130 = vector.load %arg4[%c0_54, %c0_55] : memref<256x64xbf16, #tpu.memory_space<vmem>>, vector<256x64xbf16>
    %cst_56 = arith.constant dense<0.000000e+00> : vector<8x64xf32>
    %131 = tpu.matmul %129, %130, %cst_56 {dimension_numbers = #tpu.dot_dimension_numbers<[1], [0], [0], [1], [0, 0, 1, 1], [], []>} : vector<8x256xbf16>, vector<256x64xbf16>, vector<8x64xf32> -> vector<8x64xf32>
    %c0_57 = arith.constant 0 : index
    %c0_58 = arith.constant 0 : index
    %c0_59 = arith.constant 0 : index
    %132 = vector.load %arg5[%c0_57, %c0_58, %c0_59] : memref<1x8x64xf32, #tpu.memory_space<vmem>>, vector<1x8x64xf32>
    %133 = vector.shape_cast %132 : vector<1x8x64xf32> to vector<8x64xf32>
    %134 = vector.shape_cast %131 : vector<8x64xf32> to vector<1x8x64xf32>
    tpu.vector_store %arg5[%c0_57, %c0_58, %c0_59], %134 {strides = array<i32>} : memref<1x8x64xf32, #tpu.memory_space<vmem>>, vector<1x8x64xf32>,
    return
  }
  func.func @transform_0(%arg0: i32) -> (i32, i32, i32) {
    %c0_i32 = arith.constant 0 : i32
    %c0_i32_0 = arith.constant 0 : i32
    %c0_i32_1 = arith.constant 0 : i32
    return %arg0, %c0_i32, %c0_i32_0 : i32, i32, i32
  }
  func.func @transform_1(%arg0: i32) -> (i32, i32) {
    %c0_i32 = arith.constant 0 : i32
    %c0_i32_0 = arith.constant 0 : i32
    %c0_i32_1 = arith.constant 0 : i32
    return %c0_i32, %c0_i32_0 : i32, i32
  }
  func.func @transform_2(%arg0: i32) -> (i32, i32) {
    %c0_i32 = arith.constant 0 : i32
    %c0_i32_0 = arith.constant 0 : i32
    %c0_i32_1 = arith.constant 0 : i32
    return %c0_i32, %c0_i32_0 : i32, i32
  }
  func.func @transform_3(%arg0: i32) -> (i32, i32) {
    %c0_i32 = arith.constant 0 : i32
    %c0_i32_0 = arith.constant 0 : i32
    %c0_i32_1 = arith.constant 0 : i32
    return %c0_i32, %c0_i32_0 : i32, i32
  }
  func.func @transform_4(%arg0: i32) -> (i32, i32, i32) {
    %c0_i32 = arith.constant 0 : i32
    %c0_i32_0 = arith.constant 0 : i32
    %c0_i32_1 = arith.constant 0 : i32
    return %arg0, %c0_i32, %c0_i32_0 : i32, i32, i32
  }
}

module attributes {stable_mosaic.version = 11 : i64} {
  func.func @_classifier_kernel(%arg0: memref<2x512xbf16, #tpu.memory_space<vmem>>, %arg1: memref<512x128xbf16, #tpu.memory_space<vmem>>, %arg2: memref<1x128xf32, #tpu.memory_space<vmem>>, %arg3: memref<2x128xf32, #tpu.memory_space<vmem>>) attributes {dimension_semantics = [], scalar_prefetch = 0 : i64, scratch_operands = 0 : i64, tpu.core_type = #tpu.core_type<tc>} {
    %c0 = arith.constant 0 : index
    %c0_0 = arith.constant 0 : index
    %0 = vector.load %arg0[%c0, %c0_0] : memref<2x512xbf16, #tpu.memory_space<vmem>>, vector<2x512xbf16>
    %c0_1 = arith.constant 0 : index
    %c0_2 = arith.constant 0 : index
    %1 = vector.load %arg1[%c0_1, %c0_2] : memref<512x128xbf16, #tpu.memory_space<vmem>>, vector<512x128xbf16>
    %cst = arith.constant dense<0.000000e+00> : vector<2x128xf32>
    %2 = tpu.matmul %0, %1, %cst {dimension_numbers = #tpu.dot_dimension_numbers<[1], [0], [0], [1], [0, 0, 1, 1], [], []>} : vector<2x512xbf16>, vector<512x128xbf16>, vector<2x128xf32> -> vector<2x128xf32>
    %c0_3 = arith.constant 0 : index
    %c0_4 = arith.constant 0 : index
    %3 = vector.load %arg2[%c0_3, %c0_4] : memref<1x128xf32, #tpu.memory_space<vmem>>, vector<1x128xf32>
    %4 = vector.broadcast %3 : vector<1x128xf32> to vector<2x128xf32>
    %5 = arith.addf %2, %4 : vector<2x128xf32>
    %c0_5 = arith.constant 0 : index
    %c0_6 = arith.constant 0 : index
    %6 = vector.load %arg3[%c0_5, %c0_6] : memref<2x128xf32, #tpu.memory_space<vmem>>, vector<2x128xf32>
    tpu.vector_store %arg3[%c0_5, %c0_6], %5 {strides = array<i32>} : memref<2x128xf32, #tpu.memory_space<vmem>>, vector<2x128xf32>,
    return
  }
}

module attributes {stable_mosaic.version = 11 : i64} {
  func.func @_ckn_fused_layer_kernel(%arg0: i32, %arg1: memref<1x8x82xf32, #tpu.memory_space<vmem>>, %arg2: memref<32x72xbf16, #tpu.memory_space<vmem>>, %arg3: memref<32x32xbf16, #tpu.memory_space<vmem>>, %arg4: memref<64x16xbf16, #tpu.memory_space<vmem>>, %arg5: memref<1x32x16xf32, #tpu.memory_space<vmem>>, %arg6: memref<72x64xbf16, #tpu.memory_space<vmem>>) attributes {dimension_semantics = [#tpu.dimension_semantics<parallel>], iteration_bounds = array<i64: 2>, scalar_prefetch = 0 : i64, scratch_operands = 1 : i64, tpu.core_type = #tpu.core_type<tc>, window_params = [{transform_indices = @transform_0, window_bounds = array<i64: 1, 8, 82>}, {pipeline_mode = #tpu.pipeline_mode<synchronous>, transform_indices = @transform_1, window_bounds = array<i64: 32, 72>}, {pipeline_mode = #tpu.pipeline_mode<synchronous>, transform_indices = @transform_2, window_bounds = array<i64: 32, 32>}, {pipeline_mode = #tpu.pipeline_mode<synchronous>, transform_indices = @transform_3, window_bounds = array<i64: 64, 16>}, {transform_indices = @transform_4, window_bounds = array<i64: 1, 32, 16>}]} {
    %0 = tpu.iota {dimensions = array<i32: 1>} : vector<1x64xi32>
    %c8_i32 = arith.constant 8 : i32
    %c0_i32 = arith.constant 0 : i32
    %1 = arith.cmpi eq, %c8_i32, %c0_i32 : i32
    %c1_i32 = arith.constant 1 : i32
    %2 = arith.select %1, %c1_i32, %c8_i32 : i32
    %3 = vector.broadcast %2 : i32 to vector<1x64xi32>
    %4 = arith.remsi %0, %3 : vector<1x64xi32>
    %c0_i32_0 = arith.constant 0 : i32
    %5 = vector.broadcast %c0_i32_0 : i32 to vector<1x64xi32>
    %6 = arith.cmpi ne, %4, %5 : vector<1x64xi32>
    %c0_i32_1 = arith.constant 0 : i32
    %7 = vector.broadcast %c0_i32_1 : i32 to vector<1x64xi32>
    %8 = arith.cmpi slt, %4, %7 : vector<1x64xi32>
    %c0_i32_2 = arith.constant 0 : i32
    %9 = arith.cmpi slt, %2, %c0_i32_2 : i32
    %10 = vector.broadcast %9 : i1 to vector<1x64xi1>
    %11 = vector.broadcast %10 : vector<1x64xi1> to vector<1x64xi1>
    %12 = arith.xori %8, %11 : vector<1x64xi1>
    %13 = arith.andi %12, %6 : vector<1x64xi1>
    %14 = vector.broadcast %2 : i32 to vector<1x64xi32>
    %15 = arith.addi %4, %14 : vector<1x64xi32>
    %16 = arith.select %13, %15, %4 : vector<1x64xi1>, vector<1x64xi32>
    %c1_i32_3 = arith.constant 1 : i32
    %17 = vector.broadcast %c1_i32_3 : i32 to vector<1x64xi32>
    %18 = arith.cmpi sge, %16, %17 : vector<1x64xi32>
    %19 = arith.extui %18 : vector<1x64xi1> to vector<1x64xi32>
    %20 = arith.sitofp %19 : vector<1x64xi32> to vector<1x64xf32>
    %c7_i32 = arith.constant 7 : i32
    %21 = vector.broadcast %c7_i32 : i32 to vector<1x64xi32>
    %22 = arith.cmpi slt, %16, %21 : vector<1x64xi32>
    %23 = arith.extui %22 : vector<1x64xi1> to vector<1x64xi32>
    %24 = arith.sitofp %23 : vector<1x64xi32> to vector<1x64xf32>
    %cst = arith.constant 0.000000e+00 : f32
    %25 = vector.broadcast %cst : f32 to vector<1x64xf32>
    %c0 = arith.constant 0 : index
    %c0_4 = arith.constant 0 : index
    %c0_5 = arith.constant 0 : index
    %26 = vector.load %arg1[%c0, %c0_4, %c0_5] : memref<1x8x82xf32, #tpu.memory_space<vmem>>, vector<1x8x64xf32>
    %27 = vector.shape_cast %26 : vector<1x8x64xf32> to vector<8x64xf32>
    %28 = vector.broadcast %20 : vector<1x64xf32> to vector<8x64xf32>
    %29 = arith.mulf %27, %28 : vector<8x64xf32>
    %30 = arith.truncf %29 : vector<8x64xf32> to vector<8x64xbf16>
    %c0_6 = arith.constant 0 : index
    %c0_7 = arith.constant 0 : index
    %31 = vector.load %arg6[%c0_6, %c0_7] : memref<72x64xbf16, #tpu.memory_space<vmem>>, vector<8x64xbf16>
    tpu.vector_store %arg6[%c0_6, %c0_7], %30 {strides = array<i32>} : memref<72x64xbf16, #tpu.memory_space<vmem>>, vector<8x64xbf16>,
    %32 = arith.mulf %29, %29 : vector<8x64xf32>
    %cst_8 = arith.constant dense<0.000000e+00> : vector<64xf32>
    %33 = vector.multi_reduction <add>, %32, %cst_8 [0] : vector<8x64xf32> to vector<64xf32>
    %34 = vector.shape_cast %33 : vector<64xf32> to vector<1x64xf32>
    %35 = arith.addf %25, %34 : vector<1x64xf32>
    %c0_9 = arith.constant 0 : index
    %c0_10 = arith.constant 0 : index
    %c1 = arith.constant 1 : index
    %36 = vector.load %arg1[%c0_9, %c0_10, %c1] : memref<1x8x82xf32, #tpu.memory_space<vmem>>, vector<1x8x64xf32>
    %37 = vector.shape_cast %36 : vector<1x8x64xf32> to vector<8x64xf32>
    %38 = arith.truncf %37 : vector<8x64xf32> to vector<8x64xbf16>
    %c8 = arith.constant 8 : index
    %c0_11 = arith.constant 0 : index
    %39 = vector.load %arg6[%c8, %c0_11] : memref<72x64xbf16, #tpu.memory_space<vmem>>, vector<8x64xbf16>
    tpu.vector_store %arg6[%c8, %c0_11], %38 {strides = array<i32>} : memref<72x64xbf16, #tpu.memory_space<vmem>>, vector<8x64xbf16>,
    %40 = arith.mulf %37, %37 : vector<8x64xf32>
    %cst_12 = arith.constant dense<0.000000e+00> : vector<64xf32>
    %41 = vector.multi_reduction <add>, %40, %cst_12 [0] : vector<8x64xf32> to vector<64xf32>
    %42 = vector.shape_cast %41 : vector<64xf32> to vector<1x64xf32>
    %43 = arith.addf %35, %42 : vector<1x64xf32>
    %c0_13 = arith.constant 0 : index
    %c0_14 = arith.constant 0 : index
    %c2 = arith.constant 2 : index
    %44 = vector.load %arg1[%c0_13, %c0_14, %c2] : memref<1x8x82xf32, #tpu.memory_space<vmem>>, vector<1x8x64xf32>
    %45 = vector.shape_cast %44 : vector<1x8x64xf32> to vector<8x64xf32>
    %46 = vector.broadcast %24 : vector<1x64xf32> to vector<8x64xf32>
    %47 = arith.mulf %45, %46 : vector<8x64xf32>
    %48 = arith.truncf %47 : vector<8x64xf32> to vector<8x64xbf16>
    %c16 = arith.constant 16 : index
    %c0_15 = arith.constant 0 : index
    %49 = vector.load %arg6[%c16, %c0_15] : memref<72x64xbf16, #tpu.memory_space<vmem>>, vector<8x64xbf16>
    tpu.vector_store %arg6[%c16, %c0_15], %48 {strides = array<i32>} : memref<72x64xbf16, #tpu.memory_space<vmem>>, vector<8x64xbf16>,
    %50 = arith.mulf %47, %47 : vector<8x64xf32>
    %cst_16 = arith.constant dense<0.000000e+00> : vector<64xf32>
    %51 = vector.multi_reduction <add>, %50, %cst_16 [0] : vector<8x64xf32> to vector<64xf32>
    %52 = vector.shape_cast %51 : vector<64xf32> to vector<1x64xf32>
    %53 = arith.addf %43, %52 : vector<1x64xf32>
    %c0_17 = arith.constant 0 : index
    %c0_18 = arith.constant 0 : index
    %c8_19 = arith.constant 8 : index
    %54 = vector.load %arg1[%c0_17, %c0_18, %c8_19] : memref<1x8x82xf32, #tpu.memory_space<vmem>>, vector<1x8x64xf32>
    %55 = vector.shape_cast %54 : vector<1x8x64xf32> to vector<8x64xf32>
    %56 = vector.broadcast %20 : vector<1x64xf32> to vector<8x64xf32>
    %57 = arith.mulf %55, %56 : vector<8x64xf32>
    %58 = arith.truncf %57 : vector<8x64xf32> to vector<8x64xbf16>
    %c24 = arith.constant 24 : index
    %c0_20 = arith.constant 0 : index
    %59 = vector.load %arg6[%c24, %c0_20] : memref<72x64xbf16, #tpu.memory_space<vmem>>, vector<8x64xbf16>
    tpu.vector_store %arg6[%c24, %c0_20], %58 {strides = array<i32>} : memref<72x64xbf16, #tpu.memory_space<vmem>>, vector<8x64xbf16>,
    %60 = arith.mulf %57, %57 : vector<8x64xf32>
    %cst_21 = arith.constant dense<0.000000e+00> : vector<64xf32>
    %61 = vector.multi_reduction <add>, %60, %cst_21 [0] : vector<8x64xf32> to vector<64xf32>
    %62 = vector.shape_cast %61 : vector<64xf32> to vector<1x64xf32>
    %63 = arith.addf %53, %62 : vector<1x64xf32>
    %c0_22 = arith.constant 0 : index
    %c0_23 = arith.constant 0 : index
    %c9 = arith.constant 9 : index
    %64 = vector.load %arg1[%c0_22, %c0_23, %c9] : memref<1x8x82xf32, #tpu.memory_space<vmem>>, vector<1x8x64xf32>
    %65 = vector.shape_cast %64 : vector<1x8x64xf32> to vector<8x64xf32>
    %66 = arith.truncf %65 : vector<8x64xf32> to vector<8x64xbf16>
    %c32 = arith.constant 32 : index
    %c0_24 = arith.constant 0 : index
    %67 = vector.load %arg6[%c32, %c0_24] : memref<72x64xbf16, #tpu.memory_space<vmem>>, vector<8x64xbf16>
    tpu.vector_store %arg6[%c32, %c0_24], %66 {strides = array<i32>} : memref<72x64xbf16, #tpu.memory_space<vmem>>, vector<8x64xbf16>,
    %68 = arith.mulf %65, %65 : vector<8x64xf32>
    %cst_25 = arith.constant dense<0.000000e+00> : vector<64xf32>
    %69 = vector.multi_reduction <add>, %68, %cst_25 [0] : vector<8x64xf32> to vector<64xf32>
    %70 = vector.shape_cast %69 : vector<64xf32> to vector<1x64xf32>
    %71 = arith.addf %63, %70 : vector<1x64xf32>
    %c0_26 = arith.constant 0 : index
    %c0_27 = arith.constant 0 : index
    %c10 = arith.constant 10 : index
    %72 = vector.load %arg1[%c0_26, %c0_27, %c10] : memref<1x8x82xf32, #tpu.memory_space<vmem>>, vector<1x8x64xf32>
    %73 = vector.shape_cast %72 : vector<1x8x64xf32> to vector<8x64xf32>
    %74 = vector.broadcast %24 : vector<1x64xf32> to vector<8x64xf32>
    %75 = arith.mulf %73, %74 : vector<8x64xf32>
    %76 = arith.truncf %75 : vector<8x64xf32> to vector<8x64xbf16>
    %c40 = arith.constant 40 : index
    %c0_28 = arith.constant 0 : index
    %77 = vector.load %arg6[%c40, %c0_28] : memref<72x64xbf16, #tpu.memory_space<vmem>>, vector<8x64xbf16>
    tpu.vector_store %arg6[%c40, %c0_28], %76 {strides = array<i32>} : memref<72x64xbf16, #tpu.memory_space<vmem>>, vector<8x64xbf16>,
    %78 = arith.mulf %75, %75 : vector<8x64xf32>
    %cst_29 = arith.constant dense<0.000000e+00> : vector<64xf32>
    %79 = vector.multi_reduction <add>, %78, %cst_29 [0] : vector<8x64xf32> to vector<64xf32>
    %80 = vector.shape_cast %79 : vector<64xf32> to vector<1x64xf32>
    %81 = arith.addf %71, %80 : vector<1x64xf32>
    %c0_30 = arith.constant 0 : index
    %c0_31 = arith.constant 0 : index
    %c16_32 = arith.constant 16 : index
    %82 = vector.load %arg1[%c0_30, %c0_31, %c16_32] : memref<1x8x82xf32, #tpu.memory_space<vmem>>, vector<1x8x64xf32>
    %83 = vector.shape_cast %82 : vector<1x8x64xf32> to vector<8x64xf32>
    %84 = vector.broadcast %20 : vector<1x64xf32> to vector<8x64xf32>
    %85 = arith.mulf %83, %84 : vector<8x64xf32>
    %86 = arith.truncf %85 : vector<8x64xf32> to vector<8x64xbf16>
    %c48 = arith.constant 48 : index
    %c0_33 = arith.constant 0 : index
    %87 = vector.load %arg6[%c48, %c0_33] : memref<72x64xbf16, #tpu.memory_space<vmem>>, vector<8x64xbf16>
    tpu.vector_store %arg6[%c48, %c0_33], %86 {strides = array<i32>} : memref<72x64xbf16, #tpu.memory_space<vmem>>, vector<8x64xbf16>,
    %88 = arith.mulf %85, %85 : vector<8x64xf32>
    %cst_34 = arith.constant dense<0.000000e+00> : vector<64xf32>
    %89 = vector.multi_reduction <add>, %88, %cst_34 [0] : vector<8x64xf32> to vector<64xf32>
    %90 = vector.shape_cast %89 : vector<64xf32> to vector<1x64xf32>
    %91 = arith.addf %81, %90 : vector<1x64xf32>
    %c0_35 = arith.constant 0 : index
    %c0_36 = arith.constant 0 : index
    %c17 = arith.constant 17 : index
    %92 = vector.load %arg1[%c0_35, %c0_36, %c17] : memref<1x8x82xf32, #tpu.memory_space<vmem>>, vector<1x8x64xf32>
    %93 = vector.shape_cast %92 : vector<1x8x64xf32> to vector<8x64xf32>
    %94 = arith.truncf %93 : vector<8x64xf32> to vector<8x64xbf16>
    %c56 = arith.constant 56 : index
    %c0_37 = arith.constant 0 : index
    %95 = vector.load %arg6[%c56, %c0_37] : memref<72x64xbf16, #tpu.memory_space<vmem>>, vector<8x64xbf16>
    tpu.vector_store %arg6[%c56, %c0_37], %94 {strides = array<i32>} : memref<72x64xbf16, #tpu.memory_space<vmem>>, vector<8x64xbf16>,
    %96 = arith.mulf %93, %93 : vector<8x64xf32>
    %cst_38 = arith.constant dense<0.000000e+00> : vector<64xf32>
    %97 = vector.multi_reduction <add>, %96, %cst_38 [0] : vector<8x64xf32> to vector<64xf32>
    %98 = vector.shape_cast %97 : vector<64xf32> to vector<1x64xf32>
    %99 = arith.addf %91, %98 : vector<1x64xf32>
    %c0_39 = arith.constant 0 : index
    %c0_40 = arith.constant 0 : index
    %c18 = arith.constant 18 : index
    %100 = vector.load %arg1[%c0_39, %c0_40, %c18] : memref<1x8x82xf32, #tpu.memory_space<vmem>>, vector<1x8x64xf32>
    %101 = vector.shape_cast %100 : vector<1x8x64xf32> to vector<8x64xf32>
    %102 = vector.broadcast %24 : vector<1x64xf32> to vector<8x64xf32>
    %103 = arith.mulf %101, %102 : vector<8x64xf32>
    %104 = arith.truncf %103 : vector<8x64xf32> to vector<8x64xbf16>
    %c64 = arith.constant 64 : index
    %c0_41 = arith.constant 0 : index
    %105 = vector.load %arg6[%c64, %c0_41] : memref<72x64xbf16, #tpu.memory_space<vmem>>, vector<8x64xbf16>
    tpu.vector_store %arg6[%c64, %c0_41], %104 {strides = array<i32>} : memref<72x64xbf16, #tpu.memory_space<vmem>>, vector<8x64xbf16>,
    %106 = arith.mulf %103, %103 : vector<8x64xf32>
    %cst_42 = arith.constant dense<0.000000e+00> : vector<64xf32>
    %107 = vector.multi_reduction <add>, %106, %cst_42 [0] : vector<8x64xf32> to vector<64xf32>
    %108 = vector.shape_cast %107 : vector<64xf32> to vector<1x64xf32>
    %109 = arith.addf %99, %108 : vector<1x64xf32>
    %cst_43 = arith.constant 9.99999974E-5 : f32
    %110 = vector.broadcast %cst_43 : f32 to vector<1x64xf32>
    %111 = arith.maximumf %109, %110 : vector<1x64xf32>
    %112 = math.sqrt %111 : vector<1x64xf32>
    %c0_44 = arith.constant 0 : index
    %c0_45 = arith.constant 0 : index
    %113 = vector.load %arg2[%c0_44, %c0_45] : memref<32x72xbf16, #tpu.memory_space<vmem>>, vector<32x72xbf16>
    %c0_46 = arith.constant 0 : index
    %c0_47 = arith.constant 0 : index
    %114 = vector.load %arg6[%c0_46, %c0_47] : memref<72x64xbf16, #tpu.memory_space<vmem>>, vector<72x64xbf16>
    %cst_48 = arith.constant dense<0.000000e+00> : vector<32x64xf32>
    %115 = tpu.matmul %113, %114, %cst_48 {dimension_numbers = #tpu.dot_dimension_numbers<[1], [0], [0], [1], [0, 0, 1, 1], [], []>} : vector<32x72xbf16>, vector<72x64xbf16>, vector<32x64xf32> -> vector<32x64xf32>
    %116 = tpu.reciprocal %112 {approx = true} : vector<1x64xf32> -> vector<1x64xf32>
    %117 = vector.broadcast %116 : vector<1x64xf32> to vector<32x64xf32>
    %118 = arith.mulf %115, %117 : vector<32x64xf32>
    %cst_49 = arith.constant 1.000000e+00 : f32
    %119 = vector.broadcast %cst_49 : f32 to vector<32x64xf32>
    %120 = arith.subf %118, %119 : vector<32x64xf32>
    %cst_50 = arith.constant 4.000000e+00 : f32
    %121 = vector.broadcast %cst_50 : f32 to vector<32x64xf32>
    %122 = arith.mulf %121, %120 : vector<32x64xf32>
    %123 = math.exp %122 : vector<32x64xf32>
    %124 = vector.broadcast %112 : vector<1x64xf32> to vector<32x64xf32>
    %125 = arith.mulf %124, %123 : vector<32x64xf32>
    %c0_51 = arith.constant 0 : index
    %c0_52 = arith.constant 0 : index
    %126 = vector.load %arg3[%c0_51, %c0_52] : memref<32x32xbf16, #tpu.memory_space<vmem>>, vector<32x32xbf16>
    %127 = arith.truncf %125 : vector<32x64xf32> to vector<32x64xbf16>
    %cst_53 = arith.constant dense<0.000000e+00> : vector<32x64xf32>
    %128 = tpu.matmul %126, %127, %cst_53 {dimension_numbers = #tpu.dot_dimension_numbers<[1], [0], [0], [1], [0, 0, 1, 1], [], []>} : vector<32x32xbf16>, vector<32x64xbf16>, vector<32x64xf32> -> vector<32x64xf32>
    %129 = arith.truncf %128 : vector<32x64xf32> to vector<32x64xbf16>
    %c0_54 = arith.constant 0 : index
    %c0_55 = arith.constant 0 : index
    %130 = vector.load %arg4[%c0_54, %c0_55] : memref<64x16xbf16, #tpu.memory_space<vmem>>, vector<64x16xbf16>
    %cst_56 = arith.constant dense<0.000000e+00> : vector<32x16xf32>
    %131 = tpu.matmul %129, %130, %cst_56 {dimension_numbers = #tpu.dot_dimension_numbers<[1], [0], [0], [1], [0, 0, 1, 1], [], []>} : vector<32x64xbf16>, vector<64x16xbf16>, vector<32x16xf32> -> vector<32x16xf32>
    %c0_57 = arith.constant 0 : index
    %c0_58 = arith.constant 0 : index
    %c0_59 = arith.constant 0 : index
    %132 = vector.load %arg5[%c0_57, %c0_58, %c0_59] : memref<1x32x16xf32, #tpu.memory_space<vmem>>, vector<1x32x16xf32>
    %133 = vector.shape_cast %132 : vector<1x32x16xf32> to vector<32x16xf32>
    %134 = vector.shape_cast %131 : vector<32x16xf32> to vector<1x32x16xf32>
    tpu.vector_store %arg5[%c0_57, %c0_58, %c0_59], %134 {strides = array<i32>} : memref<1x32x16xf32, #tpu.memory_space<vmem>>, vector<1x32x16xf32>,
    return
  }
  func.func @transform_0(%arg0: i32) -> (i32, i32, i32) {
    %c0_i32 = arith.constant 0 : i32
    %c0_i32_0 = arith.constant 0 : i32
    %c0_i32_1 = arith.constant 0 : i32
    return %arg0, %c0_i32, %c0_i32_0 : i32, i32, i32
  }
  func.func @transform_1(%arg0: i32) -> (i32, i32) {
    %c0_i32 = arith.constant 0 : i32
    %c0_i32_0 = arith.constant 0 : i32
    %c0_i32_1 = arith.constant 0 : i32
    return %c0_i32, %c0_i32_0 : i32, i32
  }
  func.func @transform_2(%arg0: i32) -> (i32, i32) {
    %c0_i32 = arith.constant 0 : i32
    %c0_i32_0 = arith.constant 0 : i32
    %c0_i32_1 = arith.constant 0 : i32
    return %c0_i32, %c0_i32_0 : i32, i32
  }
  func.func @transform_3(%arg0: i32) -> (i32, i32) {
    %c0_i32 = arith.constant 0 : i32
    %c0_i32_0 = arith.constant 0 : i32
    %c0_i32_1 = arith.constant 0 : i32
    return %c0_i32, %c0_i32_0 : i32, i32
  }
  func.func @transform_4(%arg0: i32) -> (i32, i32, i32) {
    %c0_i32 = arith.constant 0 : i32
    %c0_i32_0 = arith.constant 0 : i32
    %c0_i32_1 = arith.constant 0 : i32
    return %arg0, %c0_i32, %c0_i32_0 : i32, i32, i32
  }
}

</mosaic_0001>

<llo_original>
// kernel: _lambda_.5
$region0: #{_lambda_.5}
  #allocation0 [shape = 'u32[]', space=smem, size = 0x4, offset = 0x4, fixed_abs, tag = 'smem constant byte address 0x4 - core index']
  #allocation1 [shape = 'u32[144,128]{1,0:T(1,128)}', space=vmem, size = 0x12000, scoped, tag = 'internal scratch']
  %s0 = inlined_call_operand.vmem [shape: bf16[2,512], index: 0, kind: input, shape index: {}]
  %s1 = inlined_call_operand.vmem [shape: bf16[512,128], index: 1, kind: input, shape index: {}]
  %s2 = inlined_call_operand.vmem [shape: f32[1,128], index: 2, kind: input, shape index: {}]
  %s3 = inlined_call_operand.hbm [shape: f32[2,128], index: 3, kind: output, shape index: {}]
  %s4 = sld [smem:[#allocation0]]
  $region22: #{_lambda_.5} parent=0
    _
  %s6 = ssub.s32 1, %s4
  %s7 = scalar_select 0, %s6, %s4
  $region1: #{_lambda_.5} parent=0
    #allocation2 [shape = 'u8[1024]{0}', space=vmem, size = 0x400, scoped, tag = 'output window, operand 0, single buffered']
    #allocation3 [shape = 's32[1]{0}', space=sflag, size = 0x4, scoped, tag = 'scoped memory for _lambda_.5']
    %8 = vsyncpa [#allocation3], 0
    // Predicated region
    $region2: #{_lambda_.5} parent=1 // pred_check
      _
    $region3: #{_lambda_.5} parent=1 // pred_check_branch
      %10 = sbr.rel (0) target = $region5
    $region4: #{_lambda_.5} parent=1 // pred_region
      _
    $region5: #{_lambda_.5} parent=1 // pred_fallthru
      _
    // Predicated region
    $region6: #{_lambda_.5} parent=1 // pred_check
      _
    $region7: #{_lambda_.5} parent=1 // pred_check_branch
      %12 = sbr.rel (0) target = $region9
    $region8: #{_lambda_.5} parent=1 // pred_region
      _
    $region9: #{_lambda_.5} parent=1 // pred_fallthru
      _
    // Predicated region
    $region10: #{_lambda_.5} parent=1 // pred_check
      _
    $region11: #{_lambda_.5} parent=1 // pred_check_branch
      %14 = sbr.rel (0) target = $region13
    $region12: #{_lambda_.5} parent=1 // pred_region
      _
    $region13: #{_lambda_.5} parent=1 // pred_fallthru
      _
    %v16 = vld [vmem:[%s0] sm:$0xf]
    %v17 = vld [vmem:[%s1] sm:$0xf]
    %v18 = vld [vmem:[%s1 + $0x4] sm:$0xf]
    %v19 = vld [vmem:[%s1 + $0x8] sm:$0xf]
    %v20 = vld [vmem:[%s1 + $0xc] sm:$0xf]
    %v21 = vld [vmem:[%s1 + $0x10] sm:$0xf]
    %v22 = vld [vmem:[%s1 + $0x14] sm:$0xf]
    %v23 = vld [vmem:[%s1 + $0x18] sm:$0xf]
    %v24 = vld [vmem:[%s1 + $0x1c] sm:$0xf]
    %v25 = vld [vmem:[%s1 + $0x20] sm:$0xf]
    %v26 = vld [vmem:[%s1 + $0x24] sm:$0xf]
    %v27 = vld [vmem:[%s1 + $0x28] sm:$0xf]
    %v28 = vld [vmem:[%s1 + $0x2c] sm:$0xf]
    %v29 = vld [vmem:[%s1 + $0x30] sm:$0xf]
    %v30 = vld [vmem:[%s1 + $0x34] sm:$0xf]
    %v31 = vld [vmem:[%s1 + $0x38] sm:$0xf]
    %v32 = vld [vmem:[%s1 + $0x3c] sm:$0xf]
    %v33 = vld [vmem:[%s1 + $0x40] sm:$0xf]
    %v34 = vld [vmem:[%s1 + $0x44] sm:$0xf]
    %v35 = vld [vmem:[%s1 + $0x48] sm:$0xf]
    %v36 = vld [vmem:[%s1 + $0x4c] sm:$0xf]
    %v37 = vld [vmem:[%s1 + $0x50] sm:$0xf]
    %v38 = vld [vmem:[%s1 + $0x54] sm:$0xf]
    %v39 = vld [vmem:[%s1 + $0x58] sm:$0xf]
    %v40 = vld [vmem:[%s1 + $0x5c] sm:$0xf]
    %v41 = vld [vmem:[%s1 + $0x60] sm:$0xf]
    %v42 = vld [vmem:[%s1 + $0x64] sm:$0xf]
    %v43 = vld [vmem:[%s1 + $0x68] sm:$0xf]
    %v44 = vld [vmem:[%s1 + $0x6c] sm:$0xf]
    %v45 = vld [vmem:[%s1 + $0x70] sm:$0xf]
    %v46 = vld [vmem:[%s1 + $0x74] sm:$0xf]
    %v47 = vld [vmem:[%s1 + $0x78] sm:$0xf]
    %v48 = vld [vmem:[%s1 + $0x7c] sm:$0xf]
    %v49 = vld [vmem:[%s1 + $0x80] sm:$0xf]
    %v50 = vld [vmem:[%s1 + $0x84] sm:$0xf]
    %v51 = vld [vmem:[%s1 + $0x88] sm:$0xf]
    %v52 = vld [vmem:[%s1 + $0x8c] sm:$0xf]
    %v53 = vld [vmem:[%s1 + $0x90] sm:$0xf]
    %v54 = vld [vmem:[%s1 + $0x94] sm:$0xf]
    %v55 = vld [vmem:[%s1 + $0x98] sm:$0xf]
    %v56 = vld [vmem:[%s1 + $0x9c] sm:$0xf]
    %v57 = vld [vmem:[%s1 + $0xa0] sm:$0xf]
    %v58 = vld [vmem:[%s1 + $0xa4] sm:$0xf]
    %v59 = vld [vmem:[%s1 + $0xa8] sm:$0xf]
    %v60 = vld [vmem:[%s1 + $0xac] sm:$0xf]
    %v61 = vld [vmem:[%s1 + $0xb0] sm:$0xf]
    %v62 = vld [vmem:[%s1 + $0xb4] sm:$0xf]
    %v63 = vld [vmem:[%s1 + $0xb8] sm:$0xf]
    %v64 = vld [vmem:[%s1 + $0xbc] sm:$0xf]
    %v65 = vld [vmem:[%s1 + $0xc0] sm:$0xf]
    %v66 = vld [vmem:[%s1 + $0xc4] sm:$0xf]
    %v67 = vld [vmem:[%s1 + $0xc8] sm:$0xf]
    %v68 = vld [vmem:[%s1 + $0xcc] sm:$0xf]
    %v69 = vld [vmem:[%s1 + $0xd0] sm:$0xf]
    %v70 = vld [vmem:[%s1 + $0xd4] sm:$0xf]
    %v71 = vld [vmem:[%s1 + $0xd8] sm:$0xf]
    %v72 = vld [vmem:[%s1 + $0xdc] sm:$0xf]
    %v73 = vld [vmem:[%s1 + $0xe0] sm:$0xf]
    %v74 = vld [vmem:[%s1 + $0xe4] sm:$0xf]
    %v75 = vld [vmem:[%s1 + $0xe8] sm:$0xf]
    %v76 = vld [vmem:[%s1 + $0xec] sm:$0xf]
    %v77 = vld [vmem:[%s1 + $0xf0] sm:$0xf]
    %v78 = vld [vmem:[%s1 + $0xf4] sm:$0xf]
    %v79 = vld [vmem:[%s1 + $0xf8] sm:$0xf]
    %v80 = vld [vmem:[%s1 + $0xfc] sm:$0xf]
    %v81 = vld [vmem:[%s2] sm:$0x1]
    %v83 = vlaneseq
    %v84 = vshrl.u32 %v83, 7
    %v85 = vsub.s32 0, %v84
    %v86 = vrot.slane %v81, %v85
    %v90 = vunpack.c.l.s4 1966171168
    %v91 = vunpack.c.0.s8 %v90
    %v92 = vlaneseq
    %v93 = vshrl.u32 %v92, 7
    %v94 = vsub.s32 %v91, %v93
    %v95 = vrot.slane %v16, %v94
    %v96 = vcombine.high %v95, %v95
    %v98 = vunpack.c.l.s4 1966171168
    %v99 = vunpack.c.0.s8 %v98
    %v100 = vlaneseq
    %v101 = vshrl.u32 %v100, 7
    %v102 = vsub.s32 %v99, %v101
    %v103 = vrot.slane %v95, %v102
    %v105 = vunpack.c.l.s4 1966171168
    %v106 = vunpack.c.0.s8 %v105
    %v107 = vlaneseq
    %v108 = vshrl.u32 %v107, 7
    %v109 = vsub.s32 %v106, %v108
    %v110 = vrot.slane %v96, %v109
    %v111 = vcombine.high %v103, %v103
    %v112 = vcombine.high %v110, %v110
    %v181 = vunpack.c.l.b16 %v17
    %v182 = vunpack.c.l.b16 %v18
    %v183 = vunpack.c.l.b16 %v19
    %v184 = vunpack.c.l.b16 %v20
    %v185 = vunpack.c.l.b16 %v21
    %v186 = vunpack.c.l.b16 %v22
    %v187 = vunpack.c.l.b16 %v23
    %v188 = vunpack.c.l.b16 %v24
    %v189 = vunpack.c.l.b16 %v25
    %v190 = vunpack.c.l.b16 %v26
    %v191 = vunpack.c.l.b16 %v27
    %v192 = vunpack.c.l.b16 %v28
    %v193 = vunpack.c.l.b16 %v29
    %v194 = vunpack.c.l.b16 %v30
    %v195 = vunpack.c.l.b16 %v31
    %v196 = vunpack.c.l.b16 %v32
    %v197 = vunpack.c.l.b16 %v33
    %v198 = vunpack.c.l.b16 %v34
    %v199 = vunpack.c.l.b16 %v35
    %v200 = vunpack.c.l.b16 %v36
    %v201 = vunpack.c.l.b16 %v37
    %v202 = vunpack.c.l.b16 %v38
    %v203 = vunpack.c.l.b16 %v39
    %v204 = vunpack.c.l.b16 %v40
    %v205 = vunpack.c.l.b16 %v41
    %v206 = vunpack.c.l.b16 %v42
    %v207 = vunpack.c.l.b16 %v43
    %v208 = vunpack.c.l.b16 %v44
    %v209 = vunpack.c.l.b16 %v45
    %v210 = vunpack.c.l.b16 %v46
    %v211 = vunpack.c.l.b16 %v47
    %v212 = vunpack.c.l.b16 %v48
    %v213 = vunpack.c.l.b16 %v49
    %v214 = vunpack.c.l.b16 %v50
    %v215 = vunpack.c.l.b16 %v51
    %v216 = vunpack.c.l.b16 %v52
    %v217 = vunpack.c.l.b16 %v53
    %v218 = vunpack.c.l.b16 %v54
    %v219 = vunpack.c.l.b16 %v55
    %v220 = vunpack.c.l.b16 %v56
    %v221 = vunpack.c.l.b16 %v57
    %v222 = vunpack.c.l.b16 %v58
    %v223 = vunpack.c.l.b16 %v59
    %v224 = vunpack.c.l.b16 %v60
    %v225 = vunpack.c.l.b16 %v61
    %v226 = vunpack.c.l.b16 %v62
    %v227 = vunpack.c.l.b16 %v63
    %v228 = vunpack.c.l.b16 %v64
    %v229 = vunpack.c.l.b16 %v65
    %v230 = vunpack.c.l.b16 %v66
    %v231 = vunpack.c.l.b16 %v67
    %v232 = vunpack.c.l.b16 %v68
    %v233 = vunpack.c.l.b16 %v69
    %v234 = vunpack.c.l.b16 %v70
    %v235 = vunpack.c.l.b16 %v71
    %v236 = vunpack.c.l.b16 %v72
    %v237 = vunpack.c.l.b16 %v73
    %v238 = vunpack.c.l.b16 %v74
    %v239 = vunpack.c.l.b16 %v75
    %v240 = vunpack.c.l.b16 %v76
    %v241 = vunpack.c.l.b16 %v77
    %v242 = vunpack.c.l.b16 %v78
    %v243 = vunpack.c.l.b16 %v79
    %v244 = vunpack.c.l.b16 %v80
    %v245 = vpack.c.b16 %v182, %v181
    %v246 = vpack.c.b16 %v184, %v183
    %v247 = vpack.c.b16 %v186, %v185
    %v248 = vpack.c.b16 %v188, %v187
    %v249 = vpack.c.b16 %v190, %v189
    %v250 = vpack.c.b16 %v192, %v191
    %v251 = vpack.c.b16 %v194, %v193
    %v252 = vpack.c.b16 %v196, %v195
    %v253 = vpack.c.b16 %v198, %v197
    %v254 = vpack.c.b16 %v200, %v199
    %v255 = vpack.c.b16 %v202, %v201
    %v256 = vpack.c.b16 %v204, %v203
    %v257 = vpack.c.b16 %v206, %v205
    %v258 = vpack.c.b16 %v208, %v207
    %v259 = vpack.c.b16 %v210, %v209
    %v260 = vpack.c.b16 %v212, %v211
    %v261 = vpack.c.b16 %v214, %v213
    %v262 = vpack.c.b16 %v216, %v215
    %v263 = vpack.c.b16 %v218, %v217
    %v264 = vpack.c.b16 %v220, %v219
    %v265 = vpack.c.b16 %v222, %v221
    %v266 = vpack.c.b16 %v224, %v223
    %v267 = vpack.c.b16 %v226, %v225
    %v268 = vpack.c.b16 %v228, %v227
    %v269 = vpack.c.b16 %v230, %v229
    %v270 = vpack.c.b16 %v232, %v231
    %v271 = vpack.c.b16 %v234, %v233
    %v272 = vpack.c.b16 %v236, %v235
    %v273 = vpack.c.b16 %v238, %v237
    %v274 = vpack.c.b16 %v240, %v239
    %v275 = vpack.c.b16 %v242, %v241
    %v276 = vpack.c.b16 %v244, %v243
    %309 = vmatprep.subr.bf16.mxu0 0
    %310 = vmatpush1.bf16.msra.mxu0 %v245
    %311 = vmatprep.subr.bf16.mxu0 0
    %312 = vmatpush1.bf16.msra.mxu0 %v246
    %313 = vmatprep.subr.bf16.mxu0 0
    %314 = vmatpush1.bf16.msra.mxu0 %v247
    %315 = vmatprep.subr.bf16.mxu0 0
    %316 = vmatpush1.bf16.msra.mxu0 %v248
    %317 = vmatprep.subr.bf16.mxu0 0
    %318 = vmatpush1.bf16.msra.mxu0 %v249
    %319 = vmatprep.subr.bf16.mxu0 0
    %320 = vmatpush1.bf16.msra.mxu0 %v250
    %321 = vmatprep.subr.bf16.mxu0 0
    %322 = vmatpush1.bf16.msra.mxu0 %v251
    %323 = vmatprep.subr.bf16.mxu0 0
    %324 = vmatpush1.bf16.msra.mxu0 %v252
    %325 = vmatprep.subr.bf16.mxu0 0
    %326 = vmatpush1.bf16.msra.mxu0 %v253
    %327 = vmatprep.subr.bf16.mxu0 0
    %328 = vmatpush1.bf16.msra.mxu0 %v254
    %329 = vmatprep.subr.bf16.mxu0 0
    %330 = vmatpush1.bf16.msra.mxu0 %v255
    %331 = vmatprep.subr.bf16.mxu0 0
    %332 = vmatpush1.bf16.msra.mxu0 %v256
    %333 = vmatprep.subr.bf16.mxu0 0
    %334 = vmatpush1.bf16.msra.mxu0 %v257
    %335 = vmatprep.subr.bf16.mxu0 0
    %336 = vmatpush1.bf16.msra.mxu0 %v258
    %337 = vmatprep.subr.bf16.mxu0 0
    %338 = vmatpush1.bf16.msra.mxu0 %v259
    %339 = vmatprep.subr.bf16.mxu0 0
    %340 = vmatpush1.bf16.msra.mxu0 %v260
    %341 = vmatprep.mubr.bf16.mxu0 %v110
    %342 = vmatmul.mubr.bf16.gmra.mrb[0].mxu0 %v103
    %v343 = vpop.f32.mrb[0].mxu0
    %v344 = vadd.f32 %v86, %v343
    %v345 = vpop.f32.mrb[0].mxu0
    %v346 = vpop.f32.mrb[0].mxu0
    %v347 = vpop.f32.mrb[0].mxu0
    %348 = vdwg.mxu0
    %349 = vmatprep.subr.bf16.mxu0 0
    %350 = vmatpush1.bf16.msra.mxu0 %v261
    %351 = vmatprep.subr.bf16.mxu0 0
    %352 = vmatpush1.bf16.msra.mxu0 %v262
    %353 = vmatprep.subr.bf16.mxu0 0
    %354 = vmatpush1.bf16.msra.mxu0 %v263
    %355 = vmatprep.subr.bf16.mxu0 0
    %356 = vmatpush1.bf16.msra.mxu0 %v264
    %357 = vmatprep.subr.bf16.mxu0 0
    %358 = vmatpush1.bf16.msra.mxu0 %v265
    %359 = vmatprep.subr.bf16.mxu0 0
    %360 = vmatpush1.bf16.msra.mxu0 %v266
    %361 = vmatprep.subr.bf16.mxu0 0
    %362 = vmatpush1.bf16.msra.mxu0 %v267
    %363 = vmatprep.subr.bf16.mxu0 0
    %364 = vmatpush1.bf16.msra.mxu0 %v268
    %365 = vmatprep.subr.bf16.mxu0 0
    %366 = vmatpush1.bf16.msra.mxu0 %v269
    %367 = vmatprep.subr.bf16.mxu0 0
    %368 = vmatpush1.bf16.msra.mxu0 %v270
    %369 = vmatprep.subr.bf16.mxu0 0
    %370 = vmatpush1.bf16.msra.mxu0 %v271
    %371 = vmatprep.subr.bf16.mxu0 0
    %372 = vmatpush1.bf16.msra.mxu0 %v272
    %373 = vmatprep.subr.bf16.mxu0 0
    %374 = vmatpush1.bf16.msra.mxu0 %v273
    %375 = vmatprep.subr.bf16.mxu0 0
    %376 = vmatpush1.bf16.msra.mxu0 %v274
    %377 = vmatprep.subr.bf16.mxu0 0
    %378 = vmatpush1.bf16.msra.mxu0 %v275
    %379 = vmatprep.subr.bf16.mxu0 0
    %380 = vmatpush1.bf16.msra.mxu0 %v276
    %381 = vmatprep.mubr.bf16.mxu0 %v112
    %382 = vmatmul.mubr.bf16.gmra.mrb[0].mxu0 %v111
    %v383 = vpop.f32.mrb[0].mxu0
    %v384 = vadd.f32 %v344, %v383
    %v385 = vpop.f32.mrb[0].mxu0
    %v386 = vpop.f32.mrb[0].mxu0
    %v387 = vpop.f32.mrb[0].mxu0
    %388 = vdwg.mxu0
    %389 = vst [vmem:[#allocation2] sm:$0x3] %v384
    // Predicated region
    $region14: #{_lambda_.5} parent=1 // pred_check
      _
    $region15: #{_lambda_.5} parent=1 // pred_check_branch
      %391 = sbr.rel (0) target = $region17
    $region16: #{_lambda_.5} parent=1 // pred_region
      %s393 = ssub.s32 32, 32
      %394 = vsyncadd [#allocation3], %s393
      %s396 = sshll.u32 [#allocation2], 4
      %s397 = int_to_ptr.vmem [resolvable:$true] %s396
      %399 = dma.vmem_to_hbm [thread:$0]  %s397, 32, %s3, [#allocation3]
    $region17: #{_lambda_.5} parent=1 // pred_fallthru
      _
    // Predicated region
    $region18: #{_lambda_.5} parent=1 // pred_check
      _
    $region19: #{_lambda_.5} parent=1 // pred_check_branch
      %401 = sbr.rel (0) target = $region21
    $region20: #{_lambda_.5} parent=1 // pred_region
      %402 = dma.done [#allocation3], 32
    $region21: #{_lambda_.5} parent=1 // pred_fallthru
      _
    %403 = vsyncpa [#allocation3], 1

// kernel: _lambda_.3
$region0: #{_lambda_.3}
  #allocation0 [shape = 'u32[]', space=smem, size = 0x4, offset = 0x4, fixed_abs, tag = 'smem constant byte address 0x4 - core index']
  #allocation1 [shape = 'u32[144,128]{1,0:T(1,128)}', space=vmem, size = 0x12000, scoped, tag = 'internal scratch']
  #allocation2 [shape = 'bf16[72,256]{1,0:T(8,128)(2,1)}', space=vmem, size = 0x9000, scoped, tag = 'scratch operand']
  %s0 = inlined_call_operand.vmem [shape: f32[2,8,290], index: 0, kind: input, shape index: {}]
  %s1 = inlined_call_operand.vmem [shape: bf16[8,72], index: 1, kind: input, shape index: {}]
  %s2 = inlined_call_operand.vmem [shape: bf16[8,8], index: 2, kind: input, shape index: {}]
  %s3 = inlined_call_operand.vmem [shape: bf16[256,64], index: 3, kind: input, shape index: {}]
  %s4 = inlined_call_operand.vmem [shape: f32[2,8,64], index: 4, kind: output, shape index: {}]
  %s5 = sld [smem:[#allocation0]]
  $region49: #{_lambda_.3} parent=0
    _
  %s7 = ssub.s32 1, %s5
  %s8 = scalar_select 0, %s7, %s5
  loop: start=0, step=1, limit=4
  $region2: #{_lambda_.3} parent=0 // loop_pre_header
    _
  $region3: #{_lambda_.3} parent=0 // loop_header
    %s10 = sphi 0, %s14
    %p11 = scmp.ge.s32.totalorder %s10, 4
    %s20 = sphi 0, %s22
    %s23 = sphi 0, %s20
    %s24 = sphi 0, %s23
    %s40 = sphi 0, %s24
    %s44 = sphi 0, %s44
    %s46 = sphi 0, %s44
    %s47 = sphi 0, %s46
    %s61 = sphi 0, %s47
    %s65 = sphi 0, %s65
    %s67 = sphi 0, %s65
    %s68 = sphi 0, %s67
    %s82 = sphi 0, %s68
    %s86 = sphi 0, %s86
    %s88 = sphi 0, %s86
    %s89 = sphi 0, %s88
    %s103 = sphi 0, %s89
    %s109 = sphi 0, %s111
    %s112 = sphi 0, %s109
    %s113 = sphi 0, %s112
    %s129 = sphi 0, %s113
  $region4: #{_lambda_.3} parent=0 // loop_header_branch
    %13 = sbr.rel (%p11) target = $region8
  $region5: #{_lambda_.3} parent=0 // loop_body
    %s15 = ssub.s32 %s10, 1
    %s16 = ssub.s32 %s10, 2
    %s17 = sadd.s32 %s10, 1
    %s18 = ssub.s32 %s10, %s17
    %p19 = scmp.eq.s32.totalorder %s18, 0
    %s21 = sadd.s32 %s20, 1
    %s22 = scalar_select %p19, %s20, %s21
    %p25 = pneg %p19
    %p26 = scmp.eq.s32.totalorder %s10, 1
    %p27 = por %p25, %p26
    %p28 = scmp.ne.s32.totalorder %s20, %s23
    %p29 = scmp.eq.s32.totalorder %s10, 0
    %p30 = por %p28, %p29
    %p31 = scmp.ne.s32.totalorder %s20, %s23
    %p32 = scmp.eq.s32.totalorder %s15, 1
    %p33 = por %p31, %p32
    %p34 = scmp.ne.s32.totalorder %s23, %s24
    %p35 = scmp.eq.s32.totalorder %s15, 0
    %p36 = por %p34, %p35
    %p37 = scmp.ne.s32.totalorder %s23, %s24
    %p38 = scmp.eq.s32.totalorder %s16, 1
    %p39 = por %p37, %p38
    %p41 = scmp.ne.s32.totalorder %s24, %s40
    %p42 = scmp.eq.s32.totalorder %s16, 0
    %p43 = por %p41, %p42
    %s45 = sadd.s32 %s44, 1
    %p48 = scmp.eq.s32.totalorder %s10, 1
    %p49 = scmp.ne.s32.totalorder %s44, %s46
    %p50 = scmp.eq.s32.totalorder %s10, 0
    %p51 = por %p49, %p50
    %p52 = scmp.ne.s32.totalorder %s44, %s46
    %p53 = scmp.eq.s32.totalorder %s15, 1
    %p54 = por %p52, %p53
    %p55 = scmp.ne.s32.totalorder %s46, %s47
    %p56 = scmp.eq.s32.totalorder %s15, 0
    %p57 = por %p55, %p56
    %p58 = scmp.ne.s32.totalorder %s46, %s47
    %p59 = scmp.eq.s32.totalorder %s16, 1
    %p60 = por %p58, %p59
    %p62 = scmp.ne.s32.totalorder %s47, %s61
    %p63 = scmp.eq.s32.totalorder %s16, 0
    %p64 = por %p62, %p63
    %s66 = sadd.s32 %s65, 1
    %p69 = scmp.eq.s32.totalorder %s10, 1
    %p70 = scmp.ne.s32.totalorder %s65, %s67
    %p71 = scmp.eq.s32.totalorder %s10, 0
    %p72 = por %p70, %p71
    %p73 = scmp.ne.s32.totalorder %s65, %s67
    %p74 = scmp.eq.s32.totalorder %s15, 1
    %p75 = por %p73, %p74
    %p76 = scmp.ne.s32.totalorder %s67, %s68
    %p77 = scmp.eq.s32.totalorder %s15, 0
    %p78 = por %p76, %p77
    %p79 = scmp.ne.s32.totalorder %s67, %s68
    %p80 = scmp.eq.s32.totalorder %s16, 1
    %p81 = por %p79, %p80
    %p83 = scmp.ne.s32.totalorder %s68, %s82
    %p84 = scmp.eq.s32.totalorder %s16, 0
    %p85 = por %p83, %p84
    %s87 = sadd.s32 %s86, 1
    %p90 = scmp.eq.s32.totalorder %s10, 1
    %p91 = scmp.ne.s32.totalorder %s86, %s88
    %p92 = scmp.eq.s32.totalorder %s10, 0
    %p93 = por %p91, %p92
    %p94 = scmp.ne.s32.totalorder %s86, %s88
    %p95 = scmp.eq.s32.totalorder %s15, 1
    %p96 = por %p94, %p95
    %p97 = scmp.ne.s32.totalorder %s88, %s89
    %p98 = scmp.eq.s32.totalorder %s15, 0
    %p99 = por %p97, %p98
    %p100 = scmp.ne.s32.totalorder %s88, %s89
    %p101 = scmp.eq.s32.totalorder %s16, 1
    %p102 = por %p100, %p101
    %p104 = scmp.ne.s32.totalorder %s89, %s103
    %p105 = scmp.eq.s32.totalorder %s16, 0
    %p106 = por %p104, %p105
    %s107 = ssub.s32 %s10, %s17
    %p108 = scmp.eq.s32.totalorder %s107, 0
    %s110 = sadd.s32 %s109, 1
    %s111 = scalar_select %p108, %s109, %s110
    %p114 = pneg %p108
    %p115 = scmp.eq.s32.totalorder %s10, 1
    %p116 = por %p114, %p115
    %p117 = scmp.ne.s32.totalorder %s109, %s112
    %p118 = scmp.eq.s32.totalorder %s10, 0
    %p119 = por %p117, %p118
    %p120 = scmp.ne.s32.totalorder %s109, %s112
    %p121 = scmp.eq.s32.totalorder %s15, 1
    %p122 = por %p120, %p121
    %p123 = scmp.ne.s32.totalorder %s112, %s113
    %p124 = scmp.eq.s32.totalorder %s15, 0
    %p125 = por %p123, %p124
    %p126 = scmp.ne.s32.totalorder %s112, %s113
    %p127 = scmp.eq.s32.totalorder %s16, 1
    %p128 = por %p126, %p127
    %p130 = scmp.ne.s32.totalorder %s113, %s129
    %p131 = scmp.eq.s32.totalorder %s16, 0
    %p132 = por %p130, %p131
    %p133 = scmp.le.s32.totalorder 1, %s10
    %p134 = scmp.lt.s32.totalorder %s10, 3
    %p135 = pnand %p133, %p134
    %p136 = pneg %p135
    // Predicated region
    $region9: #{_lambda_.3} parent=5 // pred_check
      _
    $region10: #{_lambda_.3} parent=5 // pred_check_branch
      %138 = sbr.rel (%p135) target = $region12
    $region11: #{_lambda_.3} parent=5 // pred_region
      %s139 = ssub.s32 %s10, 1
      // Predicated region
      $region13: #{_lambda_.3} parent=11 // pred_check
        %p140 = pneg %p57
      $region14: #{_lambda_.3} parent=11 // pred_check_branch
        %142 = sbr.rel (%p140) target = $region16
      $region15: #{_lambda_.3} parent=11 // pred_region
        _
      $region16: #{_lambda_.3} parent=11 // pred_fallthru
        _
      // Predicated region
      $region17: #{_lambda_.3} parent=11 // pred_check
        %p143 = pneg %p78
      $region18: #{_lambda_.3} parent=11 // pred_check_branch
        %145 = sbr.rel (%p143) target = $region20
      $region19: #{_lambda_.3} parent=11 // pred_region
        _
      $region20: #{_lambda_.3} parent=11 // pred_fallthru
        _
      // Predicated region
      $region21: #{_lambda_.3} parent=11 // pred_check
        %p146 = pneg %p99
      $region22: #{_lambda_.3} parent=11 // pred_check_branch
        %148 = sbr.rel (%p146) target = $region24
      $region23: #{_lambda_.3} parent=11 // pred_region
        _
      $region24: #{_lambda_.3} parent=11 // pred_fallthru
        _
    $region12: #{_lambda_.3} parent=5 // pred_fallthru
      _
    %p149 = scmp.lt.s32.totalorder %s10, 2
    // Predicated region
    $region25: #{_lambda_.3} parent=5 // pred_check
      %p150 = pneg %p149
    $region26: #{_lambda_.3} parent=5 // pred_check_branch
      %152 = sbr.rel (%p150) target = $region28
    $region27: #{_lambda_.3} parent=5 // pred_region
      // Predicated region
      $region29: #{_lambda_.3} parent=27 // pred_check
        %p153 = pneg %p30
      $region30: #{_lambda_.3} parent=27 // pred_check_branch
        %155 = sbr.rel (%p153) target = $region32
      $region31: #{_lambda_.3} parent=27 // pred_region
        %p156 = scmp.lt.s32.totalorder %s10, 1
        %s157 = scalar_select %p156, %s10, 1
        %s158 = smul.addr %s157, 3
        %s159 = smul.addr %s158, 8
        %s160 = scalar_lea.vmem %s0, %s159
      $region32: #{_lambda_.3} parent=27 // pred_fallthru
        _
    $region28: #{_lambda_.3} parent=5 // pred_fallthru
      _
    %p161 = scmp.le.s32.totalorder 1, %s10
    %p162 = scmp.lt.s32.totalorder %s10, 3
    %p163 = pnand %p161, %p162
    %p164 = pneg %p163
    // Predicated region
    $region33: #{_lambda_.3} parent=5 // pred_check
      _
    $region34: #{_lambda_.3} parent=5 // pred_check_branch
      %166 = sbr.rel (%p163) target = $region36
    $region35: #{_lambda_.3} parent=5 // pred_region
      %s167 = ssub.s32 %s10, 1
      %p168 = scmp.lt.s32.totalorder %s15, 1
      %s169 = scalar_select %p168, %s15, 1
      %s170 = smul.addr %s169, 3
      %s171 = smul.addr %s170, 8
      %s172 = scalar_lea.vmem %s0, %s171
      %p173 = pneg %p36
      %p174 = pneg %p33
      %p175 = pneg %p57
      %p176 = pneg %p54
      %p177 = pneg %p78
      %p178 = pneg %p75
      %p179 = pneg %p99
      %p180 = pneg %p96
      %p181 = pneg %p125
      %p182 = pneg %p122
      %p183 = scmp.lt.s32.totalorder %s15, 1
      %s184 = scalar_select %p183, %s15, 1
      %s185 = smul.addr %s184, 8
      %s186 = scalar_lea.vmem %s4, %s185
      %p187 = scmp.lt.s32.totalorder %s15, 1
      %s188 = scalar_select %p187, %s15, 1
      %s189 = smul.addr %s188, 3
      %s190 = smul.addr %s189, 8
      %s191 = scalar_lea.vmem %s0, %s190
      %p192 = scmp.lt.s32.totalorder %s15, 1
      %s193 = scalar_select %p192, %s15, 1
      %s194 = smul.addr %s193, 8
      %s195 = scalar_lea.vmem %s4, %s194
      %v197 = vlaneseq
      %v198 = vand.u32 %v197, 127
      %v199 = vadd.s32 %v198, 128
      %vm200 = vcmp.lt.s32.totalorder %v198, 0
      %v201 = vsub.s32 0, %v198
      %v202 = vsel %vm200, %v201, %v198
      %v203 = vshrl.u32 %v202, 4
      %v204 = vand.u32 %v202, 15
      %v205 = vsub.s32 0, %v204
      %v206 = vsel %vm200, %v205, %v204
      %vm207 = vcmp.lt.s32.totalorder %v199, 0
      %v208 = vsub.s32 0, %v199
      %v209 = vsel %vm207, %v208, %v199
      %v210 = vshrl.u32 %v209, 4
      %v211 = vand.u32 %v209, 15
      %v212 = vsub.s32 0, %v211
      %v213 = vsel %vm207, %v212, %v211
      %vm214 = vcmp.ne.s32.totalorder %v206, 0
      %vm215 = vcmp.ne.s32.totalorder %v213, 0
      %vm216 = vcmp.lt.s32.totalorder %v206, 0
      %vm217 = vcmp.lt.s32.totalorder %v213, 0
      %vm218 = vmand %vm216, %vm214
      %vm219 = vmand %vm217, %vm215
      %v220 = vadd.s32 %v206, 16
      %v221 = vadd.s32 %v213, 16
      %v222 = vsel %vm218, %v220, %v206
      %v223 = vsel %vm219, %v221, %v213
      %vm224 = vcmp.ge.s32.totalorder %v222, 1
      %vm225 = vcmp.ge.s32.totalorder %v223, 1
      %v226 = vsel %vm224, 1, 0
      %v227 = vsel %vm225, 1, 0
      %v228 = vcvt.s32.f32 %v226
      %v229 = vcvt.s32.f32 %v227
      %vm230 = vcmp.lt.s32.totalorder %v222, 15
      %vm231 = vcmp.lt.s32.totalorder %v223, 15
      %v232 = vsel %vm230, 1, 0
      %v233 = vsel %vm231, 1, 0
      %v234 = vcvt.s32.f32 %v232
      %v235 = vcvt.s32.f32 %v233
      %v236 = vld [vmem:[%s191] sm:$0xff]
      %v237 = vld [vmem:[%s191 + $0x8] sm:$0xff]
      %v238 = vmul.f32 %v236, %v228
      %v239 = vmul.f32 %v237, %v229
      %v240 = vpack.c.bf16 %v238, %v238
      %v241 = vpack.c.bf16 %v239, %v239
      %v244 = vunpack.c.l.b16 %v240
      %v245 = vunpack.c.l.b16 %v241
      %v246 = vpack.c.b16 %v245, %v244
      %248 = vst [vmem:[#allocation2] sm:$0xff] %v246
      %v249 = vmul.f32 %v238, %v238
      %v250 = vmul.f32 %v239, %v239
      %v251 = vrot.slane %v249, 4
      %v252 = vadd.f32 %v249, %v251
      %v253 = vrot.slane %v252, 2
      %v254 = vadd.f32 %v252, %v253
      %v255 = vrot.slane %v254, 1
      %v256 = vadd.f32 %v254, %v255
      %v257 = vrot.slane %v250, 4
      %v258 = vadd.f32 %v250, %v257
      %v259 = vrot.slane %v258, 2
      %v260 = vadd.f32 %v258, %v259
      %v261 = vrot.slane %v260, 1
      %v262 = vadd.f32 %v260, %v261
      %v263 = vadd.f32 %v256, 0.0
      %v264 = vadd.f32 %v262, 0.0
      %v265 = vld [vmem:[%s191] sm:$0xff]
      %v266 = vld [vmem:[%s191 + $0x8] sm:$0xff]
      %v267 = vld [vmem:[%s191 + $0x10] sm:$0xff]
      %v268 = vpack.c.bf16 %v265, %v265
      %v269 = vpack.c.bf16 %v266, %v266
      %v270 = vpack.c.bf16 %v267, %v267
      %v274 = vunpack.c.l.b16 %v268
      %v275 = vunpack.c.l.b16 %v269
      %v276 = vunpack.c.l.b16 %v270
      %v277 = vpack.c.b16 %v275, %v274
      %v278 = vpack.c.b16 %v276, %v276
      %279 = vrot.lane.b32.xlu0 %v277, 127
      %v280 = vpop.permute.xlu0 %279
      %281 = vrot.lane.b32.xlu0 %v278, 127
      %v282 = vpop.permute.xlu0 %281
      %v283 = vrot.slane %v280, 4
      %v284 = vrot.slane %v282, 4
      %vm285 = vcmask 1043456
      %v286 = vsel %vm285, %v283, %v284
      %vm287 = vcmask 1039360
      %v288 = vsel %vm287, %v280, %v286
      %290 = vst [vmem:[#allocation2 + $0x8] sm:$0xff] %v288
      %v291 = vmul.f32 %v265, %v265
      %v292 = vmul.f32 %v266, %v266
      %v293 = vmul.f32 %v267, %v267
      %vm294 = vcmask 1047560
      %v295 = vsel %vm294, %v291, 0.0
      %v296 = vrot.slane %v295, 4
      %v297 = vadd.f32 %v295, %v296
      %v298 = vrot.slane %v297, 2
      %v299 = vadd.f32 %v297, %v298
      %v300 = vrot.slane %v299, 1
      %v301 = vadd.f32 %v299, %v300
      %v302 = vrot.slane %v292, 4
      %v303 = vadd.f32 %v292, %v302
      %v304 = vrot.slane %v303, 2
      %v305 = vadd.f32 %v303, %v304
      %v306 = vrot.slane %v305, 1
      %v307 = vadd.f32 %v305, %v306
      %vm308 = vcmask 7168
      %v309 = vsel %vm308, %v293, 0.0
      %v310 = vrot.slane %v309, 4
      %v311 = vadd.f32 %v309, %v310
      %v312 = vrot.slane %v311, 2
      %v313 = vadd.f32 %v311, %v312
      %v314 = vrot.slane %v313, 1
      %v315 = vadd.f32 %v313, %v314
      %319 = vrot.lane.b32.xlu0 %v301, 127
      %v320 = vpop.permute.xlu0 %319
      %321 = vrot.lane.b32.xlu0 %v307, 127
      %v322 = vpop.permute.xlu0 %321
      %323 = vrot.lane.b32.xlu0 %v315, 127
      %v324 = vpop.permute.xlu0 %323
      %vm325 = vcmask 1039360
      %v326 = vsel %vm325, %v320, %v322
      %v327 = vsel %vm325, %v322, %v324
      %v330 = vadd.f32 %v263, %v326
      %v331 = vadd.f32 %v264, %v327
      %v332 = vld [vmem:[%s191] sm:$0xff]
      %v333 = vld [vmem:[%s191 + $0x8] sm:$0xff]
      %v334 = vld [vmem:[%s191 + $0x10] sm:$0xff]
      %337 = vrot.lane.b32.xlu0 %v234, 2
      %v338 = vpop.permute.xlu0 %337
      %339 = vrot.lane.b32.xlu0 %v235, 2
      %v340 = vpop.permute.xlu0 %339
      %vm341 = vcmask 15360
      %v342 = vsel %vm341, %v338, %v340
      %v346 = vmul.f32 %v332, %v338
      %v347 = vmul.f32 %v333, %v342
      %v348 = vmul.f32 %v334, %v340
      %v349 = vpack.c.bf16 %v346, %v346
      %v350 = vpack.c.bf16 %v347, %v347
      %v351 = vpack.c.bf16 %v348, %v348
      %v355 = vunpack.c.l.b16 %v349
      %v356 = vunpack.c.l.b16 %v350
      %v357 = vunpack.c.l.b16 %v351
      %v358 = vpack.c.b16 %v356, %v355
      %v359 = vpack.c.b16 %v357, %v357
      %360 = vrot.lane.b32.xlu0 %v358, 126
      %v361 = vpop.permute.xlu0 %360
      %362 = vrot.lane.b32.xlu0 %v359, 126
      %v363 = vpop.permute.xlu0 %362
      %v364 = vrot.slane %v361, 4
      %v365 = vrot.slane %v363, 4
      %v366 = vsel %vm285, %v364, %v365
      %vm367 = vcmask 1031168
      %v368 = vsel %vm367, %v361, %v366
      %370 = vst [vmem:[#allocation2 + $0x10] sm:$0xff] %v368
      %v371 = vmul.f32 %v346, %v346
      %v372 = vmul.f32 %v347, %v347
      %v373 = vmul.f32 %v348, %v348
      %vm374 = vcmask 1047568
      %v375 = vsel %vm374, %v371, 0.0
      %v376 = vrot.slane %v375, 4
      %v377 = vadd.f32 %v375, %v376
      %v378 = vrot.slane %v377, 2
      %v379 = vadd.f32 %v377, %v378
      %v380 = vrot.slane %v379, 1
      %v381 = vadd.f32 %v379, %v380
      %v382 = vrot.slane %v372, 4
      %v383 = vadd.f32 %v372, %v382
      %v384 = vrot.slane %v383, 2
      %v385 = vadd.f32 %v383, %v384
      %v386 = vrot.slane %v385, 1
      %v387 = vadd.f32 %v385, %v386
      %v388 = vsel %vm341, %v373, 0.0
      %v389 = vrot.slane %v388, 4
      %v390 = vadd.f32 %v388, %v389
      %v391 = vrot.slane %v390, 2
      %v392 = vadd.f32 %v390, %v391
      %v393 = vrot.slane %v392, 1
      %v394 = vadd.f32 %v392, %v393
      %398 = vrot.lane.b32.xlu0 %v381, 126
      %v399 = vpop.permute.xlu0 %398
      %400 = vrot.lane.b32.xlu0 %v387, 126
      %v401 = vpop.permute.xlu0 %400
      %402 = vrot.lane.b32.xlu0 %v394, 126
      %v403 = vpop.permute.xlu0 %402
      %vm404 = vcmask 1031168
      %v405 = vsel %vm404, %v399, %v401
      %v406 = vsel %vm404, %v401, %v403
      %v409 = vadd.f32 %v330, %v405
      %v410 = vadd.f32 %v331, %v406
      %v411 = vld [vmem:[%s191] sm:$0xff]
      %v412 = vld [vmem:[%s191 + $0x8] sm:$0xff]
      %v413 = vld [vmem:[%s191 + $0x10] sm:$0xff]
      %416 = vrot.lane.b32.xlu0 %v228, 16
      %v417 = vpop.permute.xlu0 %416
      %418 = vrot.lane.b32.xlu0 %v229, 16
      %v419 = vpop.permute.xlu0 %418
      %vm420 = vcmask 130048
      %v421 = vsel %vm420, %v417, %v419
      %v425 = vmul.f32 %v411, %v417
      %v426 = vmul.f32 %v412, %v421
      %v427 = vmul.f32 %v413, %v419
      %v428 = vpack.c.bf16 %v425, %v425
      %v429 = vpack.c.bf16 %v426, %v426
      %v430 = vpack.c.bf16 %v427, %v427
      %v434 = vunpack.c.l.b16 %v428
      %v435 = vunpack.c.l.b16 %v429
      %v436 = vunpack.c.l.b16 %v430
      %v437 = vpack.c.b16 %v435, %v434
      %v438 = vpack.c.b16 %v436, %v436
      %439 = vrot.lane.b32.xlu0 %v437, 112
      %v440 = vpop.permute.xlu0 %439
      %441 = vrot.lane.b32.xlu0 %v438, 112
      %v442 = vpop.permute.xlu0 %441
      %v443 = vrot.slane %v440, 4
      %v444 = vrot.slane %v442, 4
      %v445 = vsel %vm285, %v443, %v444
      %vm446 = vcmask 916480
      %v447 = vsel %vm446, %v440, %v445
      %449 = vst [vmem:[#allocation2 + $0x18] sm:$0xff] %v447
      %v450 = vmul.f32 %v425, %v425
      %v451 = vmul.f32 %v426, %v426
      %v452 = vmul.f32 %v427, %v427
      %vm453 = vcmask 1047680
      %v454 = vsel %vm453, %v450, 0.0
      %v455 = vrot.slane %v454, 4
      %v456 = vadd.f32 %v454, %v455
      %v457 = vrot.slane %v456, 2
      %v458 = vadd.f32 %v456, %v457
      %v459 = vrot.slane %v458, 1
      %v460 = vadd.f32 %v458, %v459
      %v461 = vrot.slane %v451, 4
      %v462 = vadd.f32 %v451, %v461
      %v463 = vrot.slane %v462, 2
      %v464 = vadd.f32 %v462, %v463
      %v465 = vrot.slane %v464, 1
      %v466 = vadd.f32 %v464, %v465
      %v467 = vsel %vm420, %v452, 0.0
      %v468 = vrot.slane %v467, 4
      %v469 = vadd.f32 %v467, %v468
      %v470 = vrot.slane %v469, 2
      %v471 = vadd.f32 %v469, %v470
      %v472 = vrot.slane %v471, 1
      %v473 = vadd.f32 %v471, %v472
      %477 = vrot.lane.b32.xlu0 %v460, 112
      %v478 = vpop.permute.xlu0 %477
      %479 = vrot.lane.b32.xlu0 %v466, 112
      %v480 = vpop.permute.xlu0 %479
      %481 = vrot.lane.b32.xlu0 %v473, 112
      %v482 = vpop.permute.xlu0 %481
      %vm483 = vcmask 916480
      %v484 = vsel %vm483, %v478, %v480
      %v485 = vsel %vm483, %v480, %v482
      %v488 = vadd.f32 %v409, %v484
      %v489 = vadd.f32 %v410, %v485
      %v490 = vld [vmem:[%s191] sm:$0xff]
      %v491 = vld [vmem:[%s191 + $0x8] sm:$0xff]
      %v492 = vld [vmem:[%s191 + $0x10] sm:$0xff]
      %v493 = vpack.c.bf16 %v490, %v490
      %v494 = vpack.c.bf16 %v491, %v491
      %v495 = vpack.c.bf16 %v492, %v492
      %v499 = vunpack.c.l.b16 %v493
      %v500 = vunpack.c.l.b16 %v494
      %v501 = vunpack.c.l.b16 %v495
      %v502 = vpack.c.b16 %v500, %v499
      %v503 = vpack.c.b16 %v501, %v501
      %504 = vrot.lane.b32.xlu0 %v502, 111
      %v505 = vpop.permute.xlu0 %504
      %506 = vrot.lane.b32.xlu0 %v503, 111
      %v507 = vpop.permute.xlu0 %506
      %v508 = vrot.slane %v505, 4
      %v509 = vrot.slane %v507, 4
      %v510 = vsel %vm285, %v508, %v509
      %vm511 = vcmask 908288
      %v512 = vsel %vm511, %v505, %v510
      %514 = vst [vmem:[#allocation2 + $0x20] sm:$0xff] %v512
      %v515 = vmul.f32 %v490, %v490
      %v516 = vmul.f32 %v491, %v491
      %v517 = vmul.f32 %v492, %v492
      %vm518 = vcmask 1047688
      %v519 = vsel %vm518, %v515, 0.0
      %v520 = vrot.slane %v519, 4
      %v521 = vadd.f32 %v519, %v520
      %v522 = vrot.slane %v521, 2
      %v523 = vadd.f32 %v521, %v522
      %v524 = vrot.slane %v523, 1
      %v525 = vadd.f32 %v523, %v524
      %v526 = vrot.slane %v516, 4
      %v527 = vadd.f32 %v516, %v526
      %v528 = vrot.slane %v527, 2
      %v529 = vadd.f32 %v527, %v528
      %v530 = vrot.slane %v529, 1
      %v531 = vadd.f32 %v529, %v530
      %vm532 = vcmask 138240
      %v533 = vsel %vm532, %v517, 0.0
      %v534 = vrot.slane %v533, 4
      %v535 = vadd.f32 %v533, %v534
      %v536 = vrot.slane %v535, 2
      %v537 = vadd.f32 %v535, %v536
      %v538 = vrot.slane %v537, 1
      %v539 = vadd.f32 %v537, %v538
      %543 = vrot.lane.b32.xlu0 %v525, 111
      %v544 = vpop.permute.xlu0 %543
      %545 = vrot.lane.b32.xlu0 %v531, 111
      %v546 = vpop.permute.xlu0 %545
      %547 = vrot.lane.b32.xlu0 %v539, 111
      %v548 = vpop.permute.xlu0 %547
      %vm549 = vcmask 908288
      %v550 = vsel %vm549, %v544, %v546
      %v551 = vsel %vm549, %v546, %v548
      %v554 = vadd.f32 %v488, %v550
      %v555 = vadd.f32 %v489, %v551
      %v556 = vld [vmem:[%s191] sm:$0xff]
      %v557 = vld [vmem:[%s191 + $0x8] sm:$0xff]
      %v558 = vld [vmem:[%s191 + $0x10] sm:$0xff]
      %559 = vrot.lane.b32.xlu0 %v234, 18
      %v560 = vpop.permute.xlu0 %559
      %561 = vrot.lane.b32.xlu0 %v235, 18
      %v562 = vpop.permute.xlu0 %561
      %vm563 = vcmask 146432
      %v564 = vsel %vm563, %v560, %v562
      %v568 = vmul.f32 %v556, %v560
      %v569 = vmul.f32 %v557, %v564
      %v570 = vmul.f32 %v558, %v562
      %v571 = vpack.c.bf16 %v568, %v568
      %v572 = vpack.c.bf16 %v569, %v569
      %v573 = vpack.c.bf16 %v570, %v570
      %v577 = vunpack.c.l.b16 %v571
      %v578 = vunpack.c.l.b16 %v572
      %v579 = vunpack.c.l.b16 %v573
      %v580 = vpack.c.b16 %v578, %v577
      %v581 = vpack.c.b16 %v579, %v579
      %582 = vrot.lane.b32.xlu0 %v580, 110
      %v583 = vpop.permute.xlu0 %582
      %584 = vrot.lane.b32.xlu0 %v581, 110
      %v585 = vpop.permute.xlu0 %584
      %v586 = vrot.slane %v583, 4
      %v587 = vrot.slane %v585, 4
      %v588 = vsel %vm285, %v586, %v587
      %vm589 = vcmask 900096
      %v590 = vsel %vm589, %v583, %v588
      %592 = vst [vmem:[#allocation2 + $0x28] sm:$0xff] %v590
      %v593 = vmul.f32 %v568, %v568
      %v594 = vmul.f32 %v569, %v569
      %v595 = vmul.f32 %v570, %v570
      %vm596 = vcmask 1047696
      %v597 = vsel %vm596, %v593, 0.0
      %v598 = vrot.slane %v597, 4
      %v599 = vadd.f32 %v597, %v598
      %v600 = vrot.slane %v599, 2
      %v601 = vadd.f32 %v599, %v600
      %v602 = vrot.slane %v601, 1
      %v603 = vadd.f32 %v601, %v602
      %v604 = vrot.slane %v594, 4
      %v605 = vadd.f32 %v594, %v604
      %v606 = vrot.slane %v605, 2
      %v607 = vadd.f32 %v605, %v606
      %v608 = vrot.slane %v607, 1
      %v609 = vadd.f32 %v607, %v608
      %v610 = vsel %vm563, %v595, 0.0
      %v611 = vrot.slane %v610, 4
      %v612 = vadd.f32 %v610, %v611
      %v613 = vrot.slane %v612, 2
      %v614 = vadd.f32 %v612, %v613
      %v615 = vrot.slane %v614, 1
      %v616 = vadd.f32 %v614, %v615
      %620 = vrot.lane.b32.xlu0 %v603, 110
      %v621 = vpop.permute.xlu0 %620
      %622 = vrot.lane.b32.xlu0 %v609, 110
      %v623 = vpop.permute.xlu0 %622
      %624 = vrot.lane.b32.xlu0 %v616, 110
      %v625 = vpop.permute.xlu0 %624
      %vm626 = vcmask 900096
      %v627 = vsel %vm626, %v621, %v623
      %v628 = vsel %vm626, %v623, %v625
      %v631 = vadd.f32 %v554, %v627
      %v632 = vadd.f32 %v555, %v628
      %v633 = vld [vmem:[%s191] sm:$0xff]
      %v634 = vld [vmem:[%s191 + $0x8] sm:$0xff]
      %v635 = vld [vmem:[%s191 + $0x10] sm:$0xff]
      %636 = vrot.lane.b32.xlu0 %v228, 32
      %v637 = vpop.permute.xlu0 %636
      %638 = vrot.lane.b32.xlu0 %v229, 32
      %v639 = vpop.permute.xlu0 %638
      %vm640 = vcmask 261120
      %v641 = vsel %vm640, %v637, %v639
      %v645 = vmul.f32 %v633, %v637
      %v646 = vmul.f32 %v634, %v641
      %v647 = vmul.f32 %v635, %v639
      %v648 = vpack.c.bf16 %v645, %v645
      %v649 = vpack.c.bf16 %v646, %v646
      %v650 = vpack.c.bf16 %v647, %v647
      %v654 = vunpack.c.l.b16 %v648
      %v655 = vunpack.c.l.b16 %v649
      %v656 = vunpack.c.l.b16 %v650
      %v657 = vpack.c.b16 %v655, %v654
      %v658 = vpack.c.b16 %v656, %v656
      %659 = vrot.lane.b32.xlu0 %v657, 96
      %v660 = vpop.permute.xlu0 %659
      %661 = vrot.lane.b32.xlu0 %v658, 96
      %v662 = vpop.permute.xlu0 %661
      %v663 = vrot.slane %v660, 4
      %v664 = vrot.slane %v662, 4
      %v665 = vsel %vm285, %v663, %v664
      %vm666 = vcmask 785408
      %v667 = vsel %vm666, %v660, %v665
      %669 = vst [vmem:[#allocation2 + $0x30] sm:$0xff] %v667
      %v670 = vmul.f32 %v645, %v645
      %v671 = vmul.f32 %v646, %v646
      %v672 = vmul.f32 %v647, %v647
      %vm673 = vcmask 1047808
      %v674 = vsel %vm673, %v670, 0.0
      %v675 = vrot.slane %v674, 4
      %v676 = vadd.f32 %v674, %v675
      %v677 = vrot.slane %v676, 2
      %v678 = vadd.f32 %v676, %v677
      %v679 = vrot.slane %v678, 1
      %v680 = vadd.f32 %v678, %v679
      %v681 = vrot.slane %v671, 4
      %v682 = vadd.f32 %v671, %v681
      %v683 = vrot.slane %v682, 2
      %v684 = vadd.f32 %v682, %v683
      %v685 = vrot.slane %v684, 1
      %v686 = vadd.f32 %v684, %v685
      %v687 = vsel %vm640, %v672, 0.0
      %v688 = vrot.slane %v687, 4
      %v689 = vadd.f32 %v687, %v688
      %v690 = vrot.slane %v689, 2
      %v691 = vadd.f32 %v689, %v690
      %v692 = vrot.slane %v691, 1
      %v693 = vadd.f32 %v691, %v692
      %697 = vrot.lane.b32.xlu0 %v680, 96
      %v698 = vpop.permute.xlu0 %697
      %699 = vrot.lane.b32.xlu0 %v686, 96
      %v700 = vpop.permute.xlu0 %699
      %701 = vrot.lane.b32.xlu0 %v693, 96
      %v702 = vpop.permute.xlu0 %701
      %vm703 = vcmask 785408
      %v704 = vsel %vm703, %v698, %v700
      %v705 = vsel %vm703, %v700, %v702
      %v708 = vadd.f32 %v631, %v704
      %v709 = vadd.f32 %v632, %v705
      %v710 = vld [vmem:[%s191] sm:$0xff]
      %v711 = vld [vmem:[%s191 + $0x8] sm:$0xff]
      %v712 = vld [vmem:[%s191 + $0x10] sm:$0xff]
      %v713 = vpack.c.bf16 %v710, %v710
      %v714 = vpack.c.bf16 %v711, %v711
      %v715 = vpack.c.bf16 %v712, %v712
      %v719 = vunpack.c.l.b16 %v713
      %v720 = vunpack.c.l.b16 %v714
      %v721 = vunpack.c.l.b16 %v715
      %v722 = vpack.c.b16 %v720, %v719
      %v723 = vpack.c.b16 %v721, %v721
      %724 = vrot.lane.b32.xlu0 %v722, 95
      %v725 = vpop.permute.xlu0 %724
      %726 = vrot.lane.b32.xlu0 %v723, 95
      %v727 = vpop.permute.xlu0 %726
      %v728 = vrot.slane %v725, 4
      %v729 = vrot.slane %v727, 4
      %v730 = vsel %vm285, %v728, %v729
      %vm731 = vcmask 777216
      %v732 = vsel %vm731, %v725, %v730
      %734 = vst [vmem:[#allocation2 + $0x38] sm:$0xff] %v732
      %v735 = vmul.f32 %v710, %v710
      %v736 = vmul.f32 %v711, %v711
      %v737 = vmul.f32 %v712, %v712
      %vm738 = vcmask 1047816
      %v739 = vsel %vm738, %v735, 0.0
      %v740 = vrot.slane %v739, 4
      %v741 = vadd.f32 %v739, %v740
      %v742 = vrot.slane %v741, 2
      %v743 = vadd.f32 %v741, %v742
      %v744 = vrot.slane %v743, 1
      %v745 = vadd.f32 %v743, %v744
      %v746 = vrot.slane %v736, 4
      %v747 = vadd.f32 %v736, %v746
      %v748 = vrot.slane %v747, 2
      %v749 = vadd.f32 %v747, %v748
      %v750 = vrot.slane %v749, 1
      %v751 = vadd.f32 %v749, %v750
      %vm752 = vcmask 269312
      %v753 = vsel %vm752, %v737, 0.0
      %v754 = vrot.slane %v753, 4
      %v755 = vadd.f32 %v753, %v754
      %v756 = vrot.slane %v755, 2
      %v757 = vadd.f32 %v755, %v756
      %v758 = vrot.slane %v757, 1
      %v759 = vadd.f32 %v757, %v758
      %763 = vrot.lane.b32.xlu0 %v745, 95
      %v764 = vpop.permute.xlu0 %763
      %765 = vrot.lane.b32.xlu0 %v751, 95
      %v766 = vpop.permute.xlu0 %765
      %767 = vrot.lane.b32.xlu0 %v759, 95
      %v768 = vpop.permute.xlu0 %767
      %vm769 = vcmask 777216
      %v770 = vsel %vm769, %v764, %v766
      %v771 = vsel %vm769, %v766, %v768
      %v774 = vadd.f32 %v708, %v770
      %v775 = vadd.f32 %v709, %v771
      %v776 = vld [vmem:[%s191] sm:$0xff]
      %v777 = vld [vmem:[%s191 + $0x8] sm:$0xff]
      %v778 = vld [vmem:[%s191 + $0x10] sm:$0xff]
      %779 = vrot.lane.b32.xlu0 %v234, 34
      %v780 = vpop.permute.xlu0 %779
      %781 = vrot.lane.b32.xlu0 %v235, 34
      %v782 = vpop.permute.xlu0 %781
      %vm783 = vcmask 277504
      %v784 = vsel %vm783, %v780, %v782
      %v788 = vmul.f32 %v776, %v780
      %v789 = vmul.f32 %v777, %v784
      %v790 = vmul.f32 %v778, %v782
      %v791 = vpack.c.bf16 %v788, %v788
      %v792 = vpack.c.bf16 %v789, %v789
      %v793 = vpack.c.bf16 %v790, %v790
      %v797 = vunpack.c.l.b16 %v791
      %v798 = vunpack.c.l.b16 %v792
      %v799 = vunpack.c.l.b16 %v793
      %v800 = vpack.c.b16 %v798, %v797
      %v801 = vpack.c.b16 %v799, %v799
      %802 = vrot.lane.b32.xlu0 %v800, 94
      %v803 = vpop.permute.xlu0 %802
      %804 = vrot.lane.b32.xlu0 %v801, 94
      %v805 = vpop.permute.xlu0 %804
      %v806 = vrot.slane %v803, 4
      %v807 = vrot.slane %v805, 4
      %v808 = vsel %vm285, %v806, %v807
      %vm809 = vcmask 769024
      %v810 = vsel %vm809, %v803, %v808
      %812 = vst [vmem:[#allocation2 + $0x40] sm:$0xff] %v810
      %v813 = vmul.f32 %v788, %v788
      %v814 = vmul.f32 %v789, %v789
      %v815 = vmul.f32 %v790, %v790
      %vm816 = vcmask 1047824
      %v817 = vsel %vm816, %v813, 0.0
      %v818 = vrot.slane %v817, 4
      %v819 = vadd.f32 %v817, %v818
      %v820 = vrot.slane %v819, 2
      %v821 = vadd.f32 %v819, %v820
      %v822 = vrot.slane %v821, 1
      %v823 = vadd.f32 %v821, %v822
      %v824 = vrot.slane %v814, 4
      %v825 = vadd.f32 %v814, %v824
      %v826 = vrot.slane %v825, 2
      %v827 = vadd.f32 %v825, %v826
      %v828 = vrot.slane %v827, 1
      %v829 = vadd.f32 %v827, %v828
      %v830 = vsel %vm783, %v815, 0.0
      %v831 = vrot.slane %v830, 4
      %v832 = vadd.f32 %v830, %v831
      %v833 = vrot.slane %v832, 2
      %v834 = vadd.f32 %v832, %v833
      %v835 = vrot.slane %v834, 1
      %v836 = vadd.f32 %v834, %v835
      %840 = vrot.lane.b32.xlu0 %v823, 94
      %v841 = vpop.permute.xlu0 %840
      %842 = vrot.lane.b32.xlu0 %v829, 94
      %v843 = vpop.permute.xlu0 %842
      %844 = vrot.lane.b32.xlu0 %v836, 94
      %v845 = vpop.permute.xlu0 %844
      %vm846 = vcmask 769024
      %v847 = vsel %vm846, %v841, %v843
      %v848 = vsel %vm846, %v843, %v845
      %v851 = vadd.f32 %v774, %v847
      %v852 = vadd.f32 %v775, %v848
      %v853 = vmax.f32 %v851, 0.0001
      %v854 = vmax.f32 %v852, 0.0001
      %v855 = vrsqrt.pop %v853
      %v856 = vmul.f32 %v853, %v855
      %vm857 = vcmp.eq.f32.partialorder %v853, inf
      %v858 = vsel %vm857, %v853, %v856
      %vm859 = vcmp.eq.f32.partialorder %v853, 0.0
      %v860 = vand.u32 %v853, 2147483648
      %v861 = vsel %vm859, %v860, %v858
      %v862 = vrsqrt.pop %v854
      %v863 = vmul.f32 %v854, %v862
      %vm864 = vcmp.eq.f32.partialorder %v854, inf
      %v865 = vsel %vm864, %v854, %v863
      %vm866 = vcmp.eq.f32.partialorder %v854, 0.0
      %v867 = vand.u32 %v854, 2147483648
      %v868 = vsel %vm866, %v867, %v865
      %v869 = vld [vmem:[%s1] sm:$0xf]
      %v870 = vld [vmem:[#allocation2] sm:$0xff]
      %v871 = vld [vmem:[#allocation2 + $0x8] sm:$0xff]
      %v872 = vld [vmem:[#allocation2 + $0x10] sm:$0xff]
      %v873 = vld [vmem:[#allocation2 + $0x18] sm:$0xff]
      %v874 = vld [vmem:[#allocation2 + $0x20] sm:$0xff]
      %v875 = vld [vmem:[#allocation2 + $0x28] sm:$0xff]
      %v876 = vld [vmem:[#allocation2 + $0x30] sm:$0xff]
      %v877 = vld [vmem:[#allocation2 + $0x38] sm:$0xff]
      %v878 = vld [vmem:[#allocation2 + $0x40] sm:$0xff]
      %v888 = vunpack.c.l.b16 %v870
      %v889 = vunpack.c.h.b16 %v870
      %v890 = vunpack.c.l.b16 %v871
      %v891 = vunpack.c.h.b16 %v871
      %v892 = vunpack.c.l.b16 %v872
      %v893 = vunpack.c.h.b16 %v872
      %v894 = vunpack.c.l.b16 %v873
      %v895 = vunpack.c.h.b16 %v873
      %v896 = vunpack.c.l.b16 %v874
      %v897 = vunpack.c.h.b16 %v874
      %v898 = vunpack.c.l.b16 %v875
      %v899 = vunpack.c.h.b16 %v875
      %v900 = vunpack.c.l.b16 %v876
      %v901 = vunpack.c.h.b16 %v876
      %v902 = vunpack.c.l.b16 %v877
      %v903 = vunpack.c.h.b16 %v877
      %v904 = vunpack.c.l.b16 %v878
      %v905 = vunpack.c.h.b16 %v878
      %v906 = vpack.c.b16 %v890, %v888
      %v907 = vpack.c.b16 %v891, %v889
      %v908 = vpack.c.b16 %v894, %v892
      %v909 = vpack.c.b16 %v895, %v893
      %v910 = vpack.c.b16 %v898, %v896
      %v911 = vpack.c.b16 %v899, %v897
      %v912 = vpack.c.b16 %v902, %v900
      %v913 = vpack.c.b16 %v903, %v901
      %v914 = vpack.c.b16 %v904, %v904
      %v915 = vpack.c.b16 %v905, %v905
      %vm924 = vcmask 588800
      %v926 = vsel %vm924, %v869, 0
      %vm928 = vcmask 1043456
      %v930 = vsel %vm928, %v914, 0
      %v933 = vsel %vm928, %v915, 0
      %935 = vmatprep.subr.bf16.mxu0 %v907
      %936 = vmatpush1.bf16.msra.mxu0 %v906
      %937 = vmatprep.subr.bf16.mxu0 %v909
      %938 = vmatpush1.bf16.msra.mxu0 %v908
      %939 = vmatprep.subr.bf16.mxu0 %v911
      %940 = vmatpush1.bf16.msra.mxu0 %v910
      %941 = vmatprep.subr.bf16.mxu0 %v913
      %942 = vmatpush1.bf16.msra.mxu0 %v912
      %943 = vmatprep.subr.bf16.mxu0 %v933
      %944 = vmatpush1.bf16.msra.mxu0 %v930
      %945 = vmatprep.subr.bf16.mxu0 0
      %946 = vmatpush1.bf16.msra.mxu0 0
      %947 = vmatprep.subr.bf16.mxu0 0
      %948 = vmatpush1.bf16.msra.mxu0 0
      %949 = vmatprep.subr.bf16.mxu0 0
      %950 = vmatpush1.bf16.msra.mxu0 0
      %951 = vmatprep.subr.bf16.mxu0 0
      %952 = vmatpush1.bf16.msra.mxu0 0
      %953 = vmatprep.subr.bf16.mxu0 0
      %954 = vmatpush1.bf16.msra.mxu0 0
      %955 = vmatprep.subr.bf16.mxu0 0
      %956 = vmatpush1.bf16.msra.mxu0 0
      %957 = vmatprep.subr.bf16.mxu0 0
      %958 = vmatpush1.bf16.msra.mxu0 0
      %959 = vmatprep.subr.bf16.mxu0 0
      %960 = vmatpush1.bf16.msra.mxu0 0
      %961 = vmatprep.subr.bf16.mxu0 0
      %962 = vmatpush1.bf16.msra.mxu0 0
      %963 = vmatprep.subr.bf16.mxu0 0
      %964 = vmatpush1.bf16.msra.mxu0 0
      %965 = vmatprep.subr.bf16.mxu0 0
      %966 = vmatpush1.bf16.msra.mxu0 0
      %967 = vmatprep.mubr.bf16.mxu0 0
      %968 = vmatmul.mubr.bf16.gmra.mrb[0].mxu0 %v926
      %v969 = vpop.f32.mrb[0].mxu0
      %v970 = vadd.f32 0.0, %v969
      %v971 = vpop.f32.mrb[0].mxu0
      %v972 = vadd.f32 0.0, %v971
      %v973 = vpop.f32.mrb[0].mxu0
      %v974 = vpop.f32.mrb[0].mxu0
      %975 = vdwg.mxu0
      %v976 = vrcp.pop %v861
      %v977 = vrcp.pop %v868
      %v978 = vlaneseq
      %v979 = vshrl.u32 %v978, 7
      %v980 = vsub.s32 0, %v979
      %v981 = vrot.slane %v976, %v980
      %v982 = vlaneseq
      %v983 = vshrl.u32 %v982, 7
      %v984 = vsub.s32 0, %v983
      %v985 = vrot.slane %v977, %v984
      %v986 = vmul.f32 %v970, %v981
      %v987 = vmul.f32 %v972, %v985
      %v988 = vsub.f32 %v986, 1.0
      %v989 = vsub.f32 %v987, 1.0
      %v990 = vmul.f32 %v988, 4.0
      %v991 = vmul.f32 %v989, 4.0
      %v992 = vmul.f32 %v990, 1.442695
      %v993 = vpow.pop %v992
      %v994 = vmul.f32 %v991, 1.442695
      %v995 = vpow.pop %v994
      %v996 = vlaneseq
      %v997 = vshrl.u32 %v996, 7
      %v998 = vsub.s32 0, %v997
      %v999 = vrot.slane %v861, %v998
      %v1000 = vlaneseq
      %v1001 = vshrl.u32 %v1000, 7
      %v1002 = vsub.s32 0, %v1001
      %v1003 = vrot.slane %v868, %v1002
      %v1004 = vmul.f32 %v999, %v993
      %v1005 = vmul.f32 %v1003, %v995
      %v1006 = vld [vmem:[%s2] sm:$0xf]
      %v1007 = vpack.c.bf16 %v1004, %v1004
      %v1008 = vpack.c.bf16 %v1005, %v1005
      %vm1009 = vcmask 64512
      %v1011 = vsel %vm1009, %v1006, 0
      %v1014 = vsel %vm928, %v1007, 0
      %v1017 = vsel %vm928, %v1008, 0
      %1019 = vmatprep.subr.bf16.mxu0 %v1017
      %1020 = vmatpush1.bf16.msra.mxu0 %v1014
      %1021 = vmatprep.subr.bf16.mxu0 0
      %1022 = vmatpush1.bf16.msra.mxu0 0
      %1023 = vmatprep.subr.bf16.mxu0 0
      %1024 = vmatpush1.bf16.msra.mxu0 0
      %1025 = vmatprep.subr.bf16.mxu0 0
      %1026 = vmatpush1.bf16.msra.mxu0 0
      %1027 = vmatprep.subr.bf16.mxu0 0
      %1028 = vmatpush1.bf16.msra.mxu0 0
      %1029 = vmatprep.subr.bf16.mxu0 0
      %1030 = vmatpush1.bf16.msra.mxu0 0
      %1031 = vmatprep.subr.bf16.mxu0 0
      %1032 = vmatpush1.bf16.msra.mxu0 0
      %1033 = vmatprep.subr.bf16.mxu0 0
      %1034 = vmatpush1.bf16.msra.mxu0 0
      %1035 = vmatprep.subr.bf16.mxu0 0
      %1036 = vmatpush1.bf16.msra.mxu0 0
      %1037 = vmatprep.subr.bf16.mxu0 0
      %1038 = vmatpush1.bf16.msra.mxu0 0
      %1039 = vmatprep.subr.bf16.mxu0 0
      %1040 = vmatpush1.bf16.msra.mxu0 0
      %1041 = vmatprep.subr.bf16.mxu0 0
      %1042 = vmatpush1.bf16.msra.mxu0 0
      %1043 = vmatprep.subr.bf16.mxu0 0
      %1044 = vmatpush1.bf16.msra.mxu0 0
      %1045 = vmatprep.subr.bf16.mxu0 0
      %1046 = vmatpush1.bf16.msra.mxu0 0
      %1047 = vmatprep.subr.bf16.mxu0 0
      %1048 = vmatpush1.bf16.msra.mxu0 0
      %1049 = vmatprep.subr.bf16.mxu0 0
      %1050 = vmatpush1.bf16.msra.mxu0 0
      %1051 = vmatprep.mubr.bf16.mxu0 0
      %1052 = vmatmul.mubr.bf16.gmra.mrb[0].mxu0 %v1011
      %v1053 = vpop.f32.mrb[0].mxu0
      %v1054 = vadd.f32 0.0, %v1053
      %v1055 = vpop.f32.mrb[0].mxu0
      %v1056 = vadd.f32 0.0, %v1055
      %v1057 = vpop.f32.mrb[0].mxu0
      %v1058 = vpop.f32.mrb[0].mxu0
      %1059 = vdwg.mxu0
      %v1060 = vpack.c.bf16 %v1054, %v1054
      %v1061 = vpack.c.bf16 %v1056, %v1056
      %v1062 = vld [vmem:[%s3] sm:$0xf]
      %v1063 = vld [vmem:[%s3 + $0x4] sm:$0xf]
      %v1064 = vld [vmem:[%s3 + $0x8] sm:$0xf]
      %v1065 = vld [vmem:[%s3 + $0xc] sm:$0xf]
      %v1066 = vld [vmem:[%s3 + $0x10] sm:$0xf]
      %v1067 = vld [vmem:[%s3 + $0x14] sm:$0xf]
      %v1068 = vld [vmem:[%s3 + $0x18] sm:$0xf]
      %v1069 = vld [vmem:[%s3 + $0x1c] sm:$0xf]
      %v1070 = vld [vmem:[%s3 + $0x20] sm:$0xf]
      %v1071 = vld [vmem:[%s3 + $0x24] sm:$0xf]
      %v1072 = vld [vmem:[%s3 + $0x28] sm:$0xf]
      %v1073 = vld [vmem:[%s3 + $0x2c] sm:$0xf]
      %v1074 = vld [vmem:[%s3 + $0x30] sm:$0xf]
      %v1075 = vld [vmem:[%s3 + $0x34] sm:$0xf]
      %v1076 = vld [vmem:[%s3 + $0x38] sm:$0xf]
      %v1077 = vld [vmem:[%s3 + $0x3c] sm:$0xf]
      %v1078 = vld [vmem:[%s3 + $0x40] sm:$0xf]
      %v1079 = vld [vmem:[%s3 + $0x44] sm:$0xf]
      %v1080 = vld [vmem:[%s3 + $0x48] sm:$0xf]
      %v1081 = vld [vmem:[%s3 + $0x4c] sm:$0xf]
      %v1082 = vld [vmem:[%s3 + $0x50] sm:$0xf]
      %v1083 = vld [vmem:[%s3 + $0x54] sm:$0xf]
      %v1084 = vld [vmem:[%s3 + $0x58] sm:$0xf]
      %v1085 = vld [vmem:[%s3 + $0x5c] sm:$0xf]
      %v1086 = vld [vmem:[%s3 + $0x60] sm:$0xf]
      %v1087 = vld [vmem:[%s3 + $0x64] sm:$0xf]
      %v1088 = vld [vmem:[%s3 + $0x68] sm:$0xf]
      %v1089 = vld [vmem:[%s3 + $0x6c] sm:$0xf]
      %v1090 = vld [vmem:[%s3 + $0x70] sm:$0xf]
      %v1091 = vld [vmem:[%s3 + $0x74] sm:$0xf]
      %v1092 = vld [vmem:[%s3 + $0x78] sm:$0xf]
      %v1093 = vld [vmem:[%s3 + $0x7c] sm:$0xf]
      %v1126 = vunpack.c.l.b16 %v1062
      %v1127 = vunpack.c.l.b16 %v1063
      %v1128 = vunpack.c.l.b16 %v1064
      %v1129 = vunpack.c.l.b16 %v1065
      %v1130 = vunpack.c.l.b16 %v1066
      %v1131 = vunpack.c.l.b16 %v1067
      %v1132 = vunpack.c.l.b16 %v1068
      %v1133 = vunpack.c.l.b16 %v1069
      %v1134 = vunpack.c.l.b16 %v1070
      %v1135 = vunpack.c.l.b16 %v1071
      %v1136 = vunpack.c.l.b16 %v1072
      %v1137 = vunpack.c.l.b16 %v1073
      %v1138 = vunpack.c.l.b16 %v1074
      %v1139 = vunpack.c.l.b16 %v1075
      %v1140 = vunpack.c.l.b16 %v1076
      %v1141 = vunpack.c.l.b16 %v1077
      %v1142 = vunpack.c.l.b16 %v1078
      %v1143 = vunpack.c.l.b16 %v1079
      %v1144 = vunpack.c.l.b16 %v1080
      %v1145 = vunpack.c.l.b16 %v1081
      %v1146 = vunpack.c.l.b16 %v1082
      %v1147 = vunpack.c.l.b16 %v1083
      %v1148 = vunpack.c.l.b16 %v1084
      %v1149 = vunpack.c.l.b16 %v1085
      %v1150 = vunpack.c.l.b16 %v1086
      %v1151 = vunpack.c.l.b16 %v1087
      %v1152 = vunpack.c.l.b16 %v1088
      %v1153 = vunpack.c.l.b16 %v1089
      %v1154 = vunpack.c.l.b16 %v1090
      %v1155 = vunpack.c.l.b16 %v1091
      %v1156 = vunpack.c.l.b16 %v1092
      %v1157 = vunpack.c.l.b16 %v1093
      %v1158 = vpack.c.b16 %v1127, %v1126
      %v1159 = vpack.c.b16 %v1129, %v1128
      %v1160 = vpack.c.b16 %v1131, %v1130
      %v1161 = vpack.c.b16 %v1133, %v1132
      %v1162 = vpack.c.b16 %v1135, %v1134
      %v1163 = vpack.c.b16 %v1137, %v1136
      %v1164 = vpack.c.b16 %v1139, %v1138
      %v1165 = vpack.c.b16 %v1141, %v1140
      %v1166 = vpack.c.b16 %v1143, %v1142
      %v1167 = vpack.c.b16 %v1145, %v1144
      %v1168 = vpack.c.b16 %v1147, %v1146
      %v1169 = vpack.c.b16 %v1149, %v1148
      %v1170 = vpack.c.b16 %v1151, %v1150
      %v1171 = vpack.c.b16 %v1153, %v1152
      %v1172 = vpack.c.b16 %v1155, %v1154
      %v1173 = vpack.c.b16 %v1157, %v1156
      %1190 = vmatprep.subr.bf16.mxu0 0
      %1191 = vmatpush1.bf16.msra.mxu0 %v1158
      %1192 = vmatprep.subr.bf16.mxu0 0
      %1193 = vmatpush1.bf16.msra.mxu0 %v1159
      %1194 = vmatprep.subr.bf16.mxu0 0
      %1195 = vmatpush1.bf16.msra.mxu0 %v1160
      %1196 = vmatprep.subr.bf16.mxu0 0
      %1197 = vmatpush1.bf16.msra.mxu0 %v1161
      %1198 = vmatprep.subr.bf16.mxu0 0
      %1199 = vmatpush1.bf16.msra.mxu0 %v1162
      %1200 = vmatprep.subr.bf16.mxu0 0
      %1201 = vmatpush1.bf16.msra.mxu0 %v1163
      %1202 = vmatprep.subr.bf16.mxu0 0
      %1203 = vmatpush1.bf16.msra.mxu0 %v1164
      %1204 = vmatprep.subr.bf16.mxu0 0
      %1205 = vmatpush1.bf16.msra.mxu0 %v1165
      %1206 = vmatprep.subr.bf16.mxu0 0
      %1207 = vmatpush1.bf16.msra.mxu0 %v1166
      %1208 = vmatprep.subr.bf16.mxu0 0
      %1209 = vmatpush1.bf16.msra.mxu0 %v1167
      %1210 = vmatprep.subr.bf16.mxu0 0
      %1211 = vmatpush1.bf16.msra.mxu0 %v1168
      %1212 = vmatprep.subr.bf16.mxu0 0
      %1213 = vmatpush1.bf16.msra.mxu0 %v1169
      %1214 = vmatprep.subr.bf16.mxu0 0
      %1215 = vmatpush1.bf16.msra.mxu0 %v1170
      %1216 = vmatprep.subr.bf16.mxu0 0
      %1217 = vmatpush1.bf16.msra.mxu0 %v1171
      %1218 = vmatprep.subr.bf16.mxu0 0
      %1219 = vmatpush1.bf16.msra.mxu0 %v1172
      %1220 = vmatprep.subr.bf16.mxu0 0
      %1221 = vmatpush1.bf16.msra.mxu0 %v1173
      %1222 = vmatprep.mubr.bf16.mxu0 %v1061
      %1223 = vmatmul.mubr.bf16.gmra.mrb[0].mxu0 %v1060
      %v1224 = vpop.f32.mrb[0].mxu0
      %v1225 = vadd.f32 0.0, %v1224
      %v1226 = vpop.f32.mrb[0].mxu0
      %v1227 = vpop.f32.mrb[0].mxu0
      %v1228 = vpop.f32.mrb[0].mxu0
      %1229 = vdwg.mxu0
      %vm1230 = vcmask 523264
      %1231 = vst.msk [vmem:[%s195] sm:$0xff] %vm1230, %v1225
      %p1232 = scmp.lt.s32.totalorder %s15, 1
      %s1233 = scalar_select %p1232, %s15, 1
      %s1234 = smul.addr %s1233, 8
      %s1235 = scalar_lea.vmem %s4, %s1234
      // Predicated region
      $region37: #{_lambda_.3} parent=35 // pred_check
        %p1236 = pneg %p122
      $region38: #{_lambda_.3} parent=35 // pred_check_branch
        %1238 = sbr.rel (%p1236) target = $region40
      $region39: #{_lambda_.3} parent=35 // pred_region
        _
      $region40: #{_lambda_.3} parent=35 // pred_fallthru
        _
    $region36: #{_lambda_.3} parent=5 // pred_fallthru
      _
    %p1239 = scmp.le.s32.totalorder 2, %s10
    // Predicated region
    $region41: #{_lambda_.3} parent=5 // pred_check
      %p1240 = pneg %p1239
    $region42: #{_lambda_.3} parent=5 // pred_check_branch
      %1242 = sbr.rel (%p1240) target = $region44
    $region43: #{_lambda_.3} parent=5 // pred_region
      %s1243 = ssub.s32 %s10, 2
      // Predicated region
      $region45: #{_lambda_.3} parent=43 // pred_check
        %p1244 = pneg %p128
      $region46: #{_lambda_.3} parent=43 // pred_check_branch
        %1246 = sbr.rel (%p1244) target = $region48
      $region47: #{_lambda_.3} parent=43 // pred_region
        %p1247 = scmp.lt.s32.totalorder %s16, 1
        %s1248 = scalar_select %p1247, %s16, 1
        %s1249 = smul.addr %s1248, 8
        %s1250 = scalar_lea.vmem %s4, %s1249
      $region48: #{_lambda_.3} parent=43 // pred_fallthru
        _
    $region44: #{_lambda_.3} parent=5 // pred_fallthru
      _
  $region6: #{_lambda_.3} parent=0 // loop_footer
    %s14 = sadd.s32 1, %s10
  $region7: #{_lambda_.3} parent=0 // loop_footer_branch
    %9 = sbr.rel target = $region3
  $region8: #{_lambda_.3} parent=0 // loop_exit
    _

// kernel: _lambda_.4
$region0: #{_lambda_.4}
  #allocation0 [shape = 'u32[]', space=smem, size = 0x4, offset = 0x4, fixed_abs, tag = 'smem constant byte address 0x4 - core index']
  #allocation1 [shape = 'u32[144,128]{1,0:T(1,128)}', space=vmem, size = 0x12000, scoped, tag = 'internal scratch']
  #allocation2 [shape = 'bf16[72,64]{1,0:T(8,128)(2,1)}', space=vmem, size = 0x4800, scoped, tag = 'scratch operand']
  %s0 = inlined_call_operand.vmem [shape: f32[2,8,82], index: 0, kind: input, shape index: {}]
  %s1 = inlined_call_operand.vmem [shape: bf16[32,72], index: 1, kind: input, shape index: {}]
  %s2 = inlined_call_operand.vmem [shape: bf16[32,32], index: 2, kind: input, shape index: {}]
  %s3 = inlined_call_operand.vmem [shape: bf16[64,16], index: 3, kind: input, shape index: {}]
  %s4 = inlined_call_operand.vmem [shape: f32[2,32,16], index: 4, kind: output, shape index: {}]
  %s5 = sld [smem:[#allocation0]]
  $region49: #{_lambda_.4} parent=0
    _
  %s7 = ssub.s32 1, %s5
  %s8 = scalar_select 0, %s7, %s5
  loop: start=0, step=1, limit=4
  $region2: #{_lambda_.4} parent=0 // loop_pre_header
    _
  $region3: #{_lambda_.4} parent=0 // loop_header
    %s10 = sphi 0, %s14
    %p11 = scmp.ge.s32.totalorder %s10, 4
    %s20 = sphi 0, %s22
    %s23 = sphi 0, %s20
    %s24 = sphi 0, %s23
    %s40 = sphi 0, %s24
    %s44 = sphi 0, %s44
    %s46 = sphi 0, %s44
    %s47 = sphi 0, %s46
    %s61 = sphi 0, %s47
    %s65 = sphi 0, %s65
    %s67 = sphi 0, %s65
    %s68 = sphi 0, %s67
    %s82 = sphi 0, %s68
    %s86 = sphi 0, %s86
    %s88 = sphi 0, %s86
    %s89 = sphi 0, %s88
    %s103 = sphi 0, %s89
    %s109 = sphi 0, %s111
    %s112 = sphi 0, %s109
    %s113 = sphi 0, %s112
    %s129 = sphi 0, %s113
  $region4: #{_lambda_.4} parent=0 // loop_header_branch
    %13 = sbr.rel (%p11) target = $region8
  $region5: #{_lambda_.4} parent=0 // loop_body
    %s15 = ssub.s32 %s10, 1
    %s16 = ssub.s32 %s10, 2
    %s17 = sadd.s32 %s10, 1
    %s18 = ssub.s32 %s10, %s17
    %p19 = scmp.eq.s32.totalorder %s18, 0
    %s21 = sadd.s32 %s20, 1
    %s22 = scalar_select %p19, %s20, %s21
    %p25 = pneg %p19
    %p26 = scmp.eq.s32.totalorder %s10, 1
    %p27 = por %p25, %p26
    %p28 = scmp.ne.s32.totalorder %s20, %s23
    %p29 = scmp.eq.s32.totalorder %s10, 0
    %p30 = por %p28, %p29
    %p31 = scmp.ne.s32.totalorder %s20, %s23
    %p32 = scmp.eq.s32.totalorder %s15, 1
    %p33 = por %p31, %p32
    %p34 = scmp.ne.s32.totalorder %s23, %s24
    %p35 = scmp.eq.s32.totalorder %s15, 0
    %p36 = por %p34, %p35
    %p37 = scmp.ne.s32.totalorder %s23, %s24
    %p38 = scmp.eq.s32.totalorder %s16, 1
    %p39 = por %p37, %p38
    %p41 = scmp.ne.s32.totalorder %s24, %s40
    %p42 = scmp.eq.s32.totalorder %s16, 0
    %p43 = por %p41, %p42
    %s45 = sadd.s32 %s44, 1
    %p48 = scmp.eq.s32.totalorder %s10, 1
    %p49 = scmp.ne.s32.totalorder %s44, %s46
    %p50 = scmp.eq.s32.totalorder %s10, 0
    %p51 = por %p49, %p50
    %p52 = scmp.ne.s32.totalorder %s44, %s46
    %p53 = scmp.eq.s32.totalorder %s15, 1
    %p54 = por %p52, %p53
    %p55 = scmp.ne.s32.totalorder %s46, %s47
    %p56 = scmp.eq.s32.totalorder %s15, 0
    %p57 = por %p55, %p56
    %p58 = scmp.ne.s32.totalorder %s46, %s47
    %p59 = scmp.eq.s32.totalorder %s16, 1
    %p60 = por %p58, %p59
    %p62 = scmp.ne.s32.totalorder %s47, %s61
    %p63 = scmp.eq.s32.totalorder %s16, 0
    %p64 = por %p62, %p63
    %s66 = sadd.s32 %s65, 1
    %p69 = scmp.eq.s32.totalorder %s10, 1
    %p70 = scmp.ne.s32.totalorder %s65, %s67
    %p71 = scmp.eq.s32.totalorder %s10, 0
    %p72 = por %p70, %p71
    %p73 = scmp.ne.s32.totalorder %s65, %s67
    %p74 = scmp.eq.s32.totalorder %s15, 1
    %p75 = por %p73, %p74
    %p76 = scmp.ne.s32.totalorder %s67, %s68
    %p77 = scmp.eq.s32.totalorder %s15, 0
    %p78 = por %p76, %p77
    %p79 = scmp.ne.s32.totalorder %s67, %s68
    %p80 = scmp.eq.s32.totalorder %s16, 1
    %p81 = por %p79, %p80
    %p83 = scmp.ne.s32.totalorder %s68, %s82
    %p84 = scmp.eq.s32.totalorder %s16, 0
    %p85 = por %p83, %p84
    %s87 = sadd.s32 %s86, 1
    %p90 = scmp.eq.s32.totalorder %s10, 1
    %p91 = scmp.ne.s32.totalorder %s86, %s88
    %p92 = scmp.eq.s32.totalorder %s10, 0
    %p93 = por %p91, %p92
    %p94 = scmp.ne.s32.totalorder %s86, %s88
    %p95 = scmp.eq.s32.totalorder %s15, 1
    %p96 = por %p94, %p95
    %p97 = scmp.ne.s32.totalorder %s88, %s89
    %p98 = scmp.eq.s32.totalorder %s15, 0
    %p99 = por %p97, %p98
    %p100 = scmp.ne.s32.totalorder %s88, %s89
    %p101 = scmp.eq.s32.totalorder %s16, 1
    %p102 = por %p100, %p101
    %p104 = scmp.ne.s32.totalorder %s89, %s103
    %p105 = scmp.eq.s32.totalorder %s16, 0
    %p106 = por %p104, %p105
    %s107 = ssub.s32 %s10, %s17
    %p108 = scmp.eq.s32.totalorder %s107, 0
    %s110 = sadd.s32 %s109, 1
    %s111 = scalar_select %p108, %s109, %s110
    %p114 = pneg %p108
    %p115 = scmp.eq.s32.totalorder %s10, 1
    %p116 = por %p114, %p115
    %p117 = scmp.ne.s32.totalorder %s109, %s112
    %p118 = scmp.eq.s32.totalorder %s10, 0
    %p119 = por %p117, %p118
    %p120 = scmp.ne.s32.totalorder %s109, %s112
    %p121 = scmp.eq.s32.totalorder %s15, 1
    %p122 = por %p120, %p121
    %p123 = scmp.ne.s32.totalorder %s112, %s113
    %p124 = scmp.eq.s32.totalorder %s15, 0
    %p125 = por %p123, %p124
    %p126 = scmp.ne.s32.totalorder %s112, %s113
    %p127 = scmp.eq.s32.totalorder %s16, 1
    %p128 = por %p126, %p127
    %p130 = scmp.ne.s32.totalorder %s113, %s129
    %p131 = scmp.eq.s32.totalorder %s16, 0
    %p132 = por %p130, %p131
    %p133 = scmp.le.s32.totalorder 1, %s10
    %p134 = scmp.lt.s32.totalorder %s10, 3
    %p135 = pnand %p133, %p134
    %p136 = pneg %p135
    // Predicated region
    $region9: #{_lambda_.4} parent=5 // pred_check
      _
    $region10: #{_lambda_.4} parent=5 // pred_check_branch
      %138 = sbr.rel (%p135) target = $region12
    $region11: #{_lambda_.4} parent=5 // pred_region
      %s139 = ssub.s32 %s10, 1
      // Predicated region
      $region13: #{_lambda_.4} parent=11 // pred_check
        %p140 = pneg %p57
      $region14: #{_lambda_.4} parent=11 // pred_check_branch
        %142 = sbr.rel (%p140) target = $region16
      $region15: #{_lambda_.4} parent=11 // pred_region
        _
      $region16: #{_lambda_.4} parent=11 // pred_fallthru
        _
      // Predicated region
      $region17: #{_lambda_.4} parent=11 // pred_check
        %p143 = pneg %p78
      $region18: #{_lambda_.4} parent=11 // pred_check_branch
        %145 = sbr.rel (%p143) target = $region20
      $region19: #{_lambda_.4} parent=11 // pred_region
        _
      $region20: #{_lambda_.4} parent=11 // pred_fallthru
        _
      // Predicated region
      $region21: #{_lambda_.4} parent=11 // pred_check
        %p146 = pneg %p99
      $region22: #{_lambda_.4} parent=11 // pred_check_branch
        %148 = sbr.rel (%p146) target = $region24
      $region23: #{_lambda_.4} parent=11 // pred_region
        _
      $region24: #{_lambda_.4} parent=11 // pred_fallthru
        _
    $region12: #{_lambda_.4} parent=5 // pred_fallthru
      _
    %p149 = scmp.lt.s32.totalorder %s10, 2
    // Predicated region
    $region25: #{_lambda_.4} parent=5 // pred_check
      %p150 = pneg %p149
    $region26: #{_lambda_.4} parent=5 // pred_check_branch
      %152 = sbr.rel (%p150) target = $region28
    $region27: #{_lambda_.4} parent=5 // pred_region
      // Predicated region
      $region29: #{_lambda_.4} parent=27 // pred_check
        %p153 = pneg %p30
      $region30: #{_lambda_.4} parent=27 // pred_check_branch
        %155 = sbr.rel (%p153) target = $region32
      $region31: #{_lambda_.4} parent=27 // pred_region
        %p156 = scmp.lt.s32.totalorder %s10, 1
        %s157 = scalar_select %p156, %s10, 1
        %s158 = smul.addr %s157, 8
        %s159 = scalar_lea.vmem %s0, %s158
      $region32: #{_lambda_.4} parent=27 // pred_fallthru
        _
    $region28: #{_lambda_.4} parent=5 // pred_fallthru
      _
    %p160 = scmp.le.s32.totalorder 1, %s10
    %p161 = scmp.lt.s32.totalorder %s10, 3
    %p162 = pnand %p160, %p161
    %p163 = pneg %p162
    // Predicated region
    $region33: #{_lambda_.4} parent=5 // pred_check
      _
    $region34: #{_lambda_.4} parent=5 // pred_check_branch
      %165 = sbr.rel (%p162) target = $region36
    $region35: #{_lambda_.4} parent=5 // pred_region
      %s166 = ssub.s32 %s10, 1
      %p167 = scmp.lt.s32.totalorder %s15, 1
      %s168 = scalar_select %p167, %s15, 1
      %s169 = smul.addr %s168, 8
      %s170 = scalar_lea.vmem %s0, %s169
      %p171 = pneg %p36
      %p172 = pneg %p33
      %p173 = pneg %p57
      %p174 = pneg %p54
      %p175 = pneg %p78
      %p176 = pneg %p75
      %p177 = pneg %p99
      %p178 = pneg %p96
      %p179 = pneg %p125
      %p180 = pneg %p122
      %p181 = scmp.lt.s32.totalorder %s15, 1
      %s182 = scalar_select %p181, %s15, 1
      %s183 = smul.addr %s182, 4
      %s184 = smul.addr %s183, 8
      %s185 = scalar_lea.vmem %s4, %s184
      %p186 = scmp.lt.s32.totalorder %s15, 1
      %s187 = scalar_select %p186, %s15, 1
      %s188 = smul.addr %s187, 8
      %s189 = scalar_lea.vmem %s0, %s188
      %p190 = scmp.lt.s32.totalorder %s15, 1
      %s191 = scalar_select %p190, %s15, 1
      %s192 = smul.addr %s191, 4
      %s193 = smul.addr %s192, 8
      %s194 = scalar_lea.vmem %s4, %s193
      %v196 = vlaneseq
      %v197 = vand.u32 %v196, 127
      %vm198 = vcmp.lt.s32.totalorder %v197, 0
      %v199 = vsub.s32 0, %v197
      %v200 = vsel %vm198, %v199, %v197
      %v201 = vshrl.u32 %v200, 3
      %v202 = vand.u32 %v200, 7
      %v203 = vsub.s32 0, %v202
      %v204 = vsel %vm198, %v203, %v202
      %vm205 = vcmp.ne.s32.totalorder %v204, 0
      %vm206 = vcmp.lt.s32.totalorder %v204, 0
      %vm207 = vmand %vm206, %vm205
      %v208 = vadd.s32 %v204, 8
      %v209 = vsel %vm207, %v208, %v204
      %vm210 = vcmp.ge.s32.totalorder %v209, 1
      %v211 = vsel %vm210, 1, 0
      %v212 = vcvt.s32.f32 %v211
      %vm213 = vcmp.lt.s32.totalorder %v209, 7
      %v214 = vsel %vm213, 1, 0
      %v215 = vcvt.s32.f32 %v214
      %v216 = vld [vmem:[%s189] sm:$0xff]
      %v217 = vmul.f32 %v216, %v212
      %v218 = vpack.c.bf16 %v217, %v217
      %vm219 = vcmask 519168
      %220 = vst.msk [vmem:[#allocation2] sm:$0xf] %vm219, %v218
      %v221 = vmul.f32 %v217, %v217
      %vm222 = vcmask 523264
      %v223 = vsel %vm222, %v221, 0.0
      %v224 = vrot.slane %v223, 4
      %v225 = vadd.f32 %v223, %v224
      %v226 = vrot.slane %v225, 2
      %v227 = vadd.f32 %v225, %v226
      %v228 = vrot.slane %v227, 1
      %v229 = vadd.f32 %v227, %v228
      %v230 = vadd.f32 %v229, 0.0
      %v231 = vld [vmem:[%s189] sm:$0xff]
      %v232 = vpack.c.bf16 %v231, %v231
      %v234 = vunpack.c.l.b16 %v232
      %v235 = vpack.c.b16 %v234, %v234
      %236 = vrot.lane.b32.xlu0 %v235, 127
      %v237 = vpop.permute.xlu0 %236
      %239 = vst.msk [vmem:[#allocation2 + $0x4] sm:$0xf] %vm219, %v237
      %v240 = vmul.f32 %v231, %v231
      %vm241 = vcmask 531464
      %v242 = vsel %vm241, %v240, 0.0
      %v243 = vrot.slane %v242, 4
      %v244 = vadd.f32 %v242, %v243
      %v245 = vrot.slane %v244, 2
      %v246 = vadd.f32 %v244, %v245
      %v247 = vrot.slane %v246, 1
      %v248 = vadd.f32 %v246, %v247
      %250 = vrot.lane.b32.xlu0 %v248, 127
      %v251 = vpop.permute.xlu0 %250
      %v253 = vadd.f32 %v230, %v251
      %v254 = vld [vmem:[%s189] sm:$0xff]
      %256 = vrot.lane.b32.xlu0 %v215, 2
      %v257 = vpop.permute.xlu0 %256
      %v259 = vmul.f32 %v254, %v257
      %v260 = vpack.c.bf16 %v259, %v259
      %v262 = vunpack.c.l.b16 %v260
      %v263 = vpack.c.b16 %v262, %v262
      %264 = vrot.lane.b32.xlu0 %v263, 126
      %v265 = vpop.permute.xlu0 %264
      %267 = vst.msk [vmem:[#allocation2 + $0x8] sm:$0xf] %vm219, %v265
      %v268 = vmul.f32 %v259, %v259
      %vm269 = vcmask 539664
      %v270 = vsel %vm269, %v268, 0.0
      %v271 = vrot.slane %v270, 4
      %v272 = vadd.f32 %v270, %v271
      %v273 = vrot.slane %v272, 2
      %v274 = vadd.f32 %v272, %v273
      %v275 = vrot.slane %v274, 1
      %v276 = vadd.f32 %v274, %v275
      %278 = vrot.lane.b32.xlu0 %v276, 126
      %v279 = vpop.permute.xlu0 %278
      %v281 = vadd.f32 %v253, %v279
      %v282 = vld [vmem:[%s189] sm:$0xff]
      %284 = vrot.lane.b32.xlu0 %v212, 8
      %v285 = vpop.permute.xlu0 %284
      %v287 = vmul.f32 %v282, %v285
      %v288 = vpack.c.bf16 %v287, %v287
      %v290 = vunpack.c.l.b16 %v288
      %v291 = vpack.c.b16 %v290, %v290
      %292 = vrot.lane.b32.xlu0 %v291, 120
      %v293 = vpop.permute.xlu0 %292
      %295 = vst.msk [vmem:[#allocation2 + $0xc] sm:$0xf] %vm219, %v293
      %v296 = vmul.f32 %v287, %v287
      %vm297 = vcmask 588864
      %v298 = vsel %vm297, %v296, 0.0
      %v299 = vrot.slane %v298, 4
      %v300 = vadd.f32 %v298, %v299
      %v301 = vrot.slane %v300, 2
      %v302 = vadd.f32 %v300, %v301
      %v303 = vrot.slane %v302, 1
      %v304 = vadd.f32 %v302, %v303
      %306 = vrot.lane.b32.xlu0 %v304, 120
      %v307 = vpop.permute.xlu0 %306
      %v309 = vadd.f32 %v281, %v307
      %v310 = vld [vmem:[%s189] sm:$0xff]
      %v311 = vpack.c.bf16 %v310, %v310
      %v313 = vunpack.c.l.b16 %v311
      %v314 = vpack.c.b16 %v313, %v313
      %315 = vrot.lane.b32.xlu0 %v314, 119
      %v316 = vpop.permute.xlu0 %315
      %318 = vst.msk [vmem:[#allocation2 + $0x10] sm:$0xf] %vm219, %v316
      %v319 = vmul.f32 %v310, %v310
      %vm320 = vcmask 597064
      %v321 = vsel %vm320, %v319, 0.0
      %v322 = vrot.slane %v321, 4
      %v323 = vadd.f32 %v321, %v322
      %v324 = vrot.slane %v323, 2
      %v325 = vadd.f32 %v323, %v324
      %v326 = vrot.slane %v325, 1
      %v327 = vadd.f32 %v325, %v326
      %329 = vrot.lane.b32.xlu0 %v327, 119
      %v330 = vpop.permute.xlu0 %329
      %v332 = vadd.f32 %v309, %v330
      %v333 = vld [vmem:[%s189] sm:$0xff]
      %334 = vrot.lane.b32.xlu0 %v215, 10
      %v335 = vpop.permute.xlu0 %334
      %v337 = vmul.f32 %v333, %v335
      %v338 = vpack.c.bf16 %v337, %v337
      %v340 = vunpack.c.l.b16 %v338
      %v341 = vpack.c.b16 %v340, %v340
      %342 = vrot.lane.b32.xlu0 %v341, 118
      %v343 = vpop.permute.xlu0 %342
      %345 = vst.msk [vmem:[#allocation2 + $0x14] sm:$0xf] %vm219, %v343
      %v346 = vmul.f32 %v337, %v337
      %vm347 = vcmask 605264
      %v348 = vsel %vm347, %v346, 0.0
      %v349 = vrot.slane %v348, 4
      %v350 = vadd.f32 %v348, %v349
      %v351 = vrot.slane %v350, 2
      %v352 = vadd.f32 %v350, %v351
      %v353 = vrot.slane %v352, 1
      %v354 = vadd.f32 %v352, %v353
      %356 = vrot.lane.b32.xlu0 %v354, 118
      %v357 = vpop.permute.xlu0 %356
      %v359 = vadd.f32 %v332, %v357
      %v360 = vld [vmem:[%s189] sm:$0xff]
      %361 = vrot.lane.b32.xlu0 %v212, 16
      %v362 = vpop.permute.xlu0 %361
      %v364 = vmul.f32 %v360, %v362
      %v365 = vpack.c.bf16 %v364, %v364
      %v367 = vunpack.c.l.b16 %v365
      %v368 = vpack.c.b16 %v367, %v367
      %369 = vrot.lane.b32.xlu0 %v368, 112
      %v370 = vpop.permute.xlu0 %369
      %372 = vst.msk [vmem:[#allocation2 + $0x18] sm:$0xf] %vm219, %v370
      %v373 = vmul.f32 %v364, %v364
      %vm374 = vcmask 654464
      %v375 = vsel %vm374, %v373, 0.0
      %v376 = vrot.slane %v375, 4
      %v377 = vadd.f32 %v375, %v376
      %v378 = vrot.slane %v377, 2
      %v379 = vadd.f32 %v377, %v378
      %v380 = vrot.slane %v379, 1
      %v381 = vadd.f32 %v379, %v380
      %383 = vrot.lane.b32.xlu0 %v381, 112
      %v384 = vpop.permute.xlu0 %383
      %v386 = vadd.f32 %v359, %v384
      %v387 = vld [vmem:[%s189] sm:$0xff]
      %v388 = vpack.c.bf16 %v387, %v387
      %v390 = vunpack.c.l.b16 %v388
      %v391 = vpack.c.b16 %v390, %v390
      %392 = vrot.lane.b32.xlu0 %v391, 111
      %v393 = vpop.permute.xlu0 %392
      %395 = vst.msk [vmem:[#allocation2 + $0x1c] sm:$0xf] %vm219, %v393
      %v396 = vmul.f32 %v387, %v387
      %vm397 = vcmask 662664
      %v398 = vsel %vm397, %v396, 0.0
      %v399 = vrot.slane %v398, 4
      %v400 = vadd.f32 %v398, %v399
      %v401 = vrot.slane %v400, 2
      %v402 = vadd.f32 %v400, %v401
      %v403 = vrot.slane %v402, 1
      %v404 = vadd.f32 %v402, %v403
      %406 = vrot.lane.b32.xlu0 %v404, 111
      %v407 = vpop.permute.xlu0 %406
      %v409 = vadd.f32 %v386, %v407
      %v410 = vld [vmem:[%s189] sm:$0xff]
      %411 = vrot.lane.b32.xlu0 %v215, 18
      %v412 = vpop.permute.xlu0 %411
      %v414 = vmul.f32 %v410, %v412
      %v415 = vpack.c.bf16 %v414, %v414
      %v417 = vunpack.c.l.b16 %v415
      %v418 = vpack.c.b16 %v417, %v417
      %419 = vrot.lane.b32.xlu0 %v418, 110
      %v420 = vpop.permute.xlu0 %419
      %422 = vst.msk [vmem:[#allocation2 + $0x20] sm:$0xf] %vm219, %v420
      %v423 = vmul.f32 %v414, %v414
      %vm424 = vcmask 670864
      %v425 = vsel %vm424, %v423, 0.0
      %v426 = vrot.slane %v425, 4
      %v427 = vadd.f32 %v425, %v426
      %v428 = vrot.slane %v427, 2
      %v429 = vadd.f32 %v427, %v428
      %v430 = vrot.slane %v429, 1
      %v431 = vadd.f32 %v429, %v430
      %433 = vrot.lane.b32.xlu0 %v431, 110
      %v434 = vpop.permute.xlu0 %433
      %v436 = vadd.f32 %v409, %v434
      %v437 = vmax.f32 %v436, 0.0001
      %v438 = vrsqrt.pop %v437
      %v439 = vmul.f32 %v437, %v438
      %vm440 = vcmp.eq.f32.partialorder %v437, inf
      %v441 = vsel %vm440, %v437, %v439
      %vm442 = vcmp.eq.f32.partialorder %v437, 0.0
      %v443 = vand.u32 %v437, 2147483648
      %v444 = vsel %vm442, %v443, %v441
      %v445 = vld [vmem:[%s1] sm:$0xf]
      %v446 = vld [vmem:[%s1 + $0x4] sm:$0xf]
      %v447 = vld [vmem:[%s1 + $0x8] sm:$0xf]
      %v448 = vld [vmem:[%s1 + $0xc] sm:$0xf]
      %v449 = vld [vmem:[#allocation2] sm:$0xf]
      %v450 = vld [vmem:[#allocation2 + $0x4] sm:$0xf]
      %v451 = vld [vmem:[#allocation2 + $0x8] sm:$0xf]
      %v452 = vld [vmem:[#allocation2 + $0xc] sm:$0xf]
      %v453 = vld [vmem:[#allocation2 + $0x10] sm:$0xf]
      %v454 = vld [vmem:[#allocation2 + $0x14] sm:$0xf]
      %v455 = vld [vmem:[#allocation2 + $0x18] sm:$0xf]
      %v456 = vld [vmem:[#allocation2 + $0x1c] sm:$0xf]
      %v457 = vld [vmem:[#allocation2 + $0x20] sm:$0xf]
      %v462 = vunpack.c.l.b16 %v445
      %v463 = vunpack.c.l.b16 %v446
      %v464 = vunpack.c.l.b16 %v447
      %v465 = vunpack.c.l.b16 %v448
      %v466 = vpack.c.b16 %v463, %v462
      %v467 = vpack.c.b16 %v465, %v464
      %v477 = vunpack.c.l.b16 %v449
      %v478 = vunpack.c.l.b16 %v450
      %v479 = vunpack.c.l.b16 %v451
      %v480 = vunpack.c.l.b16 %v452
      %v481 = vunpack.c.l.b16 %v453
      %v482 = vunpack.c.l.b16 %v454
      %v483 = vunpack.c.l.b16 %v455
      %v484 = vunpack.c.l.b16 %v456
      %v485 = vunpack.c.l.b16 %v457
      %v486 = vpack.c.b16 %v478, %v477
      %v487 = vpack.c.b16 %v480, %v479
      %v488 = vpack.c.b16 %v482, %v481
      %v489 = vpack.c.b16 %v484, %v483
      %v490 = vpack.c.b16 %v485, %v485
      %vm495 = vcmask 588800
      %v497 = vsel %vm495, %v466, 0
      %v500 = vsel %vm495, %v467, 0
      %vm502 = vcmask 1043456
      %v504 = vsel %vm502, %v490, 0
      %506 = vmatprep.subr.bf16.mxu0 0
      %507 = vmatpush1.bf16.msra.mxu0 %v486
      %508 = vmatprep.subr.bf16.mxu0 0
      %509 = vmatpush1.bf16.msra.mxu0 %v487
      %510 = vmatprep.subr.bf16.mxu0 0
      %511 = vmatpush1.bf16.msra.mxu0 %v488
      %512 = vmatprep.subr.bf16.mxu0 0
      %513 = vmatpush1.bf16.msra.mxu0 %v489
      %514 = vmatprep.subr.bf16.mxu0 0
      %515 = vmatpush1.bf16.msra.mxu0 %v504
      %516 = vmatprep.subr.bf16.mxu0 0
      %517 = vmatpush1.bf16.msra.mxu0 0
      %518 = vmatprep.subr.bf16.mxu0 0
      %519 = vmatpush1.bf16.msra.mxu0 0
      %520 = vmatprep.subr.bf16.mxu0 0
      %521 = vmatpush1.bf16.msra.mxu0 0
      %522 = vmatprep.subr.bf16.mxu0 0
      %523 = vmatpush1.bf16.msra.mxu0 0
      %524 = vmatprep.subr.bf16.mxu0 0
      %525 = vmatpush1.bf16.msra.mxu0 0
      %526 = vmatprep.subr.bf16.mxu0 0
      %527 = vmatpush1.bf16.msra.mxu0 0
      %528 = vmatprep.subr.bf16.mxu0 0
      %529 = vmatpush1.bf16.msra.mxu0 0
      %530 = vmatprep.subr.bf16.mxu0 0
      %531 = vmatpush1.bf16.msra.mxu0 0
      %532 = vmatprep.subr.bf16.mxu0 0
      %533 = vmatpush1.bf16.msra.mxu0 0
      %534 = vmatprep.subr.bf16.mxu0 0
      %535 = vmatpush1.bf16.msra.mxu0 0
      %536 = vmatprep.subr.bf16.mxu0 0
      %537 = vmatpush1.bf16.msra.mxu0 0
      %538 = vmatprep.mubr.bf16.mxu0 0
      %539 = vmatmul.mubr.bf16.gmra.mrb[0].mxu0 %v497
      %v540 = vpop.f32.mrb[0].mxu0
      %v541 = vadd.f32 0.0, %v540
      %v542 = vpop.f32.mrb[0].mxu0
      %v543 = vpop.f32.mrb[0].mxu0
      %v544 = vadd.f32 0.0, %v543
      %v545 = vpop.f32.mrb[0].mxu0
      %546 = vmatprep.mubr.bf16.mxu0 0
      %547 = vmatmul.mubr.bf16.gmra.mrb[0].mxu0 %v500
      %v548 = vpop.f32.mrb[0].mxu0
      %v549 = vadd.f32 0.0, %v548
      %v550 = vpop.f32.mrb[0].mxu0
      %v551 = vpop.f32.mrb[0].mxu0
      %v552 = vadd.f32 0.0, %v551
      %v553 = vpop.f32.mrb[0].mxu0
      %554 = vdwg.mxu0
      %v555 = vrcp.pop %v444
      %v556 = vlaneseq
      %v557 = vshrl.u32 %v556, 7
      %v558 = vsub.s32 0, %v557
      %v559 = vrot.slane %v555, %v558
      %v560 = vmul.f32 %v541, %v559
      %v561 = vmul.f32 %v544, %v559
      %v562 = vmul.f32 %v549, %v559
      %v563 = vmul.f32 %v552, %v559
      %v564 = vsub.f32 %v560, 1.0
      %v565 = vsub.f32 %v561, 1.0
      %v566 = vsub.f32 %v562, 1.0
      %v567 = vsub.f32 %v563, 1.0
      %v568 = vmul.f32 %v564, 4.0
      %v569 = vmul.f32 %v565, 4.0
      %v570 = vmul.f32 %v566, 4.0
      %v571 = vmul.f32 %v567, 4.0
      %v572 = vmul.f32 %v568, 1.442695
      %v573 = vpow.pop %v572
      %v574 = vmul.f32 %v569, 1.442695
      %v575 = vpow.pop %v574
      %v576 = vmul.f32 %v570, 1.442695
      %v577 = vpow.pop %v576
      %v578 = vmul.f32 %v571, 1.442695
      %v579 = vpow.pop %v578
      %v580 = vlaneseq
      %v581 = vshrl.u32 %v580, 7
      %v582 = vsub.s32 0, %v581
      %v583 = vrot.slane %v444, %v582
      %v584 = vmul.f32 %v583, %v573
      %v585 = vmul.f32 %v583, %v575
      %v586 = vmul.f32 %v583, %v577
      %v587 = vmul.f32 %v583, %v579
      %v588 = vld [vmem:[%s2] sm:$0xf]
      %v589 = vld [vmem:[%s2 + $0x4] sm:$0xf]
      %v590 = vld [vmem:[%s2 + $0x8] sm:$0xf]
      %v591 = vld [vmem:[%s2 + $0xc] sm:$0xf]
      %v592 = vpack.c.bf16 %v585, %v584
      %v593 = vpack.c.bf16 %v587, %v586
      %v598 = vunpack.c.l.b16 %v588
      %v599 = vunpack.c.l.b16 %v589
      %v600 = vunpack.c.l.b16 %v590
      %v601 = vunpack.c.l.b16 %v591
      %v602 = vpack.c.b16 %v599, %v598
      %v603 = vpack.c.b16 %v601, %v600
      %vm604 = vcmask 261120
      %v606 = vsel %vm604, %v602, 0
      %v609 = vsel %vm604, %v603, 0
      %611 = vmatprep.subr.bf16.mxu0 0
      %612 = vmatpush1.bf16.msra.mxu0 %v592
      %613 = vmatprep.subr.bf16.mxu0 0
      %614 = vmatpush1.bf16.msra.mxu0 %v593
      %615 = vmatprep.subr.bf16.mxu0 0
      %616 = vmatpush1.bf16.msra.mxu0 0
      %617 = vmatprep.subr.bf16.mxu0 0
      %618 = vmatpush1.bf16.msra.mxu0 0
      %619 = vmatprep.subr.bf16.mxu0 0
      %620 = vmatpush1.bf16.msra.mxu0 0
      %621 = vmatprep.subr.bf16.mxu0 0
      %622 = vmatpush1.bf16.msra.mxu0 0
      %623 = vmatprep.subr.bf16.mxu0 0
      %624 = vmatpush1.bf16.msra.mxu0 0
      %625 = vmatprep.subr.bf16.mxu0 0
      %626 = vmatpush1.bf16.msra.mxu0 0
      %627 = vmatprep.subr.bf16.mxu0 0
      %628 = vmatpush1.bf16.msra.mxu0 0
      %629 = vmatprep.subr.bf16.mxu0 0
      %630 = vmatpush1.bf16.msra.mxu0 0
      %631 = vmatprep.subr.bf16.mxu0 0
      %632 = vmatpush1.bf16.msra.mxu0 0
      %633 = vmatprep.subr.bf16.mxu0 0
      %634 = vmatpush1.bf16.msra.mxu0 0
      %635 = vmatprep.subr.bf16.mxu0 0
      %636 = vmatpush1.bf16.msra.mxu0 0
      %637 = vmatprep.subr.bf16.mxu0 0
      %638 = vmatpush1.bf16.msra.mxu0 0
      %639 = vmatprep.subr.bf16.mxu0 0
      %640 = vmatpush1.bf16.msra.mxu0 0
      %641 = vmatprep.subr.bf16.mxu0 0
      %642 = vmatpush1.bf16.msra.mxu0 0
      %643 = vmatprep.mubr.bf16.mxu0 0
      %644 = vmatmul.mubr.bf16.gmra.mrb[0].mxu0 %v606
      %v645 = vpop.f32.mrb[0].mxu0
      %v646 = vadd.f32 0.0, %v645
      %v647 = vpop.f32.mrb[0].mxu0
      %v648 = vpop.f32.mrb[0].mxu0
      %v649 = vadd.f32 0.0, %v648
      %v650 = vpop.f32.mrb[0].mxu0
      %651 = vmatprep.mubr.bf16.mxu0 0
      %652 = vmatmul.mubr.bf16.gmra.mrb[0].mxu0 %v609
      %v653 = vpop.f32.mrb[0].mxu0
      %v654 = vadd.f32 0.0, %v653
      %v655 = vpop.f32.mrb[0].mxu0
      %v656 = vpop.f32.mrb[0].mxu0
      %v657 = vadd.f32 0.0, %v656
      %v658 = vpop.f32.mrb[0].mxu0
      %659 = vdwg.mxu0
      %v660 = vpack.c.bf16 %v649, %v646
      %v661 = vpack.c.bf16 %v657, %v654
      %v662 = vld [vmem:[%s3] sm:$0xf]
      %v663 = vld [vmem:[%s3 + $0x4] sm:$0xf]
      %v664 = vld [vmem:[%s3 + $0x8] sm:$0xf]
      %v665 = vld [vmem:[%s3 + $0xc] sm:$0xf]
      %v666 = vld [vmem:[%s3 + $0x10] sm:$0xf]
      %v667 = vld [vmem:[%s3 + $0x14] sm:$0xf]
      %v668 = vld [vmem:[%s3 + $0x18] sm:$0xf]
      %v669 = vld [vmem:[%s3 + $0x1c] sm:$0xf]
      %v678 = vunpack.c.l.b16 %v662
      %v679 = vunpack.c.l.b16 %v663
      %v680 = vunpack.c.l.b16 %v664
      %v681 = vunpack.c.l.b16 %v665
      %v682 = vunpack.c.l.b16 %v666
      %v683 = vunpack.c.l.b16 %v667
      %v684 = vunpack.c.l.b16 %v668
      %v685 = vunpack.c.l.b16 %v669
      %v686 = vpack.c.b16 %v679, %v678
      %v687 = vpack.c.b16 %v681, %v680
      %v688 = vpack.c.b16 %v683, %v682
      %v689 = vpack.c.b16 %v685, %v684
      %v695 = vsel %vm222, %v660, 0
      %v698 = vsel %vm222, %v661, 0
      %700 = vmatprep.subr.bf16.mxu0 0
      %701 = vmatpush1.bf16.msra.mxu0 %v686
      %702 = vmatprep.subr.bf16.mxu0 0
      %703 = vmatpush1.bf16.msra.mxu0 %v687
      %704 = vmatprep.subr.bf16.mxu0 0
      %705 = vmatpush1.bf16.msra.mxu0 %v688
      %706 = vmatprep.subr.bf16.mxu0 0
      %707 = vmatpush1.bf16.msra.mxu0 %v689
      %708 = vmatprep.subr.bf16.mxu0 0
      %709 = vmatpush1.bf16.msra.mxu0 0
      %710 = vmatprep.subr.bf16.mxu0 0
      %711 = vmatpush1.bf16.msra.mxu0 0
      %712 = vmatprep.subr.bf16.mxu0 0
      %713 = vmatpush1.bf16.msra.mxu0 0
      %714 = vmatprep.subr.bf16.mxu0 0
      %715 = vmatpush1.bf16.msra.mxu0 0
      %716 = vmatprep.subr.bf16.mxu0 0
      %717 = vmatpush1.bf16.msra.mxu0 0
      %718 = vmatprep.subr.bf16.mxu0 0
      %719 = vmatpush1.bf16.msra.mxu0 0
      %720 = vmatprep.subr.bf16.mxu0 0
      %721 = vmatpush1.bf16.msra.mxu0 0
      %722 = vmatprep.subr.bf16.mxu0 0
      %723 = vmatpush1.bf16.msra.mxu0 0
      %724 = vmatprep.subr.bf16.mxu0 0
      %725 = vmatpush1.bf16.msra.mxu0 0
      %726 = vmatprep.subr.bf16.mxu0 0
      %727 = vmatpush1.bf16.msra.mxu0 0
      %728 = vmatprep.subr.bf16.mxu0 0
      %729 = vmatpush1.bf16.msra.mxu0 0
      %730 = vmatprep.subr.bf16.mxu0 0
      %731 = vmatpush1.bf16.msra.mxu0 0
      %732 = vmatprep.mubr.bf16.mxu0 0
      %733 = vmatmul.mubr.bf16.gmra.mrb[0].mxu0 %v695
      %v734 = vpop.f32.mrb[0].mxu0
      %v735 = vadd.f32 0.0, %v734
      %v736 = vpop.f32.mrb[0].mxu0
      %v737 = vpop.f32.mrb[0].mxu0
      %v738 = vadd.f32 0.0, %v737
      %v739 = vpop.f32.mrb[0].mxu0
      %740 = vmatprep.mubr.bf16.mxu0 0
      %741 = vmatmul.mubr.bf16.gmra.mrb[0].mxu0 %v698
      %v742 = vpop.f32.mrb[0].mxu0
      %v743 = vadd.f32 0.0, %v742
      %v744 = vpop.f32.mrb[0].mxu0
      %v745 = vpop.f32.mrb[0].mxu0
      %v746 = vadd.f32 0.0, %v745
      %v747 = vpop.f32.mrb[0].mxu0
      %748 = vdwg.mxu0
      %vm749 = vcmask 130048
      %750 = vst.msk [vmem:[%s194] sm:$0xff] %vm749, %v735
      %751 = vst.msk [vmem:[%s194 + $0x8] sm:$0xff] %vm749, %v738
      %752 = vst.msk [vmem:[%s194 + $0x10] sm:$0xff] %vm749, %v743
      %753 = vst.msk [vmem:[%s194 + $0x18] sm:$0xff] %vm749, %v746
      %p754 = scmp.lt.s32.totalorder %s15, 1
      %s755 = scalar_select %p754, %s15, 1
      %s756 = smul.addr %s755, 4
      %s757 = smul.addr %s756, 8
      %s758 = scalar_lea.vmem %s4, %s757
      // Predicated region
      $region37: #{_lambda_.4} parent=35 // pred_check
        %p759 = pneg %p122
      $region38: #{_lambda_.4} parent=35 // pred_check_branch
        %761 = sbr.rel (%p759) target = $region40
      $region39: #{_lambda_.4} parent=35 // pred_region
        _
      $region40: #{_lambda_.4} parent=35 // pred_fallthru
        _
    $region36: #{_lambda_.4} parent=5 // pred_fallthru
      _
    %p762 = scmp.le.s32.totalorder 2, %s10
    // Predicated region
    $region41: #{_lambda_.4} parent=5 // pred_check
      %p763 = pneg %p762
    $region42: #{_lambda_.4} parent=5 // pred_check_branch
      %765 = sbr.rel (%p763) target = $region44
    $region43: #{_lambda_.4} parent=5 // pred_region
      %s766 = ssub.s32 %s10, 2
      // Predicated region
      $region45: #{_lambda_.4} parent=43 // pred_check
        %p767 = pneg %p128
      $region46: #{_lambda_.4} parent=43 // pred_check_branch
        %769 = sbr.rel (%p767) target = $region48
      $region47: #{_lambda_.4} parent=43 // pred_region
        %p770 = scmp.lt.s32.totalorder %s16, 1
        %s771 = scalar_select %p770, %s16, 1
        %s772 = smul.addr %s771, 4
        %s773 = smul.addr %s772, 8
        %s774 = scalar_lea.vmem %s4, %s773
      $region48: #{_lambda_.4} parent=43 // pred_fallthru
        _
    $region44: #{_lambda_.4} parent=5 // pred_fallthru
      _
  $region6: #{_lambda_.4} parent=0 // loop_footer
    %s14 = sadd.s32 1, %s10
  $region7: #{_lambda_.4} parent=0 // loop_footer_branch
    %9 = sbr.rel target = $region3
  $region8: #{_lambda_.4} parent=0 // loop_exit
    _

</llo_original>
